<compile_context>
chip_gen: v5e
topology: v5e:2x2
jax: 0.10.0
libtpu: 0.0.40
codegen_flags: <defaults>
</compile_context>

<pallas_src>
import functools
import math

import jax
import jax.numpy as jnp
from jax import lax
from jax.experimental import pallas as pl
from jax.experimental.pallas import tpu as pltpu

DICE_EPS = 1e-9


def _round_up(x, m):
    return (x + m - 1) // m * m


# ---------------------------------------------------------------------------
# Pass 1: per-tile channel statistics of h = x @ W1 + b1  (for Dice BatchNorm).
# ---------------------------------------------------------------------------
def _stats_kernel(q_ref, ub_ref, wq_ref, wub_ref, wp_ref, b1_ref,
                  sum_ref, ssq_ref, *, seq_len):
    t = pl.program_id(1)
    q = q_ref[0]                      # [1, E]
    ub = ub_ref[0]                    # [TILE_T, E]
    tile_t = ub.shape[0]

    h = (jnp.dot(q, wq_ref[...], preferred_element_type=jnp.float32)
         + jnp.dot(ub, wub_ref[...], preferred_element_type=jnp.float32)
         + jnp.dot(q * ub, wp_ref[...], preferred_element_type=jnp.float32)
         + b1_ref[...])               # [TILE_T, H0] float32

    # Mask padded seq rows out of the batch statistics.
    rows = lax.broadcasted_iota(jnp.int32, (tile_t, 1), 0) + t * tile_t
    valid = (rows < seq_len).astype(jnp.float32)          # [TILE_T, 1]
    hm = h * valid

    sum_ref[...] = jnp.sum(hm, axis=0, keepdims=True).reshape(sum_ref.shape)
    ssq_ref[...] = jnp.sum(hm * h, axis=0, keepdims=True).reshape(ssq_ref.shape)


# ---------------------------------------------------------------------------
# Pass 2: fused (folded W1) -> Dice -> (folded Linear(H0,H1) + fc2) -> score.
# ---------------------------------------------------------------------------
def _fwd_kernel(q_ref, ub_ref, wq_ref, wub_ref, wp_ref, b1_ref,
                scale_ref, shift_ref, alpha_ref, w23_ref, b23_ref, out_ref):
    q = q_ref[0]                      # [1, E]
    ub = ub_ref[0]                    # [TILE_T, E]

    h = (jnp.dot(q, wq_ref[...], preferred_element_type=jnp.float32)
         + jnp.dot(ub, wub_ref[...], preferred_element_type=jnp.float32)
         + jnp.dot(q * ub, wp_ref[...], preferred_element_type=jnp.float32)
         + b1_ref[...])               # [TILE_T, H0] float32

    # Dice with pre-folded BatchNorm scale/shift (global batch statistics).
    p = jax.nn.sigmoid(h * scale_ref[...] + shift_ref[...])
    a = h * (p + alpha_ref[...] * (1.0 - p))              # [TILE_T, H0]

    # Folded Linear(H0,H1) + fc2(H1,1): one [1,H0] x [TILE_T,H0]^T contraction,
    # producing a lane-dense [1, TILE_T] row (no 1-lane masked stores).
    score = lax.dot_general(
        w23_ref[...], a,
        dimension_numbers=(((1,), (1,)), ((), ())),
        preferred_element_type=jnp.float32)               # [1, TILE_T]
    out_ref[...] = (score + b23_ref[...]).reshape(out_ref.shape)


# ---------------------------------------------------------------------------
# Wrapper
# ---------------------------------------------------------------------------
def local_activation_unit(query, user_behavior, params, *,
                          act_dtype=jnp.float32, max_tile_t=1024):
    """query: [B, 1, E], user_behavior: [B, T, E] -> attention_score [B, T, 1].

    act_dtype: dtype of the streamed activations (q, ub) and folded W1 blocks.
      jnp.bfloat16 halves HBM/VMEM traffic on v6e/v7x (accumulation stays f32);
      float32 (default) matches the PyTorch reference numerics.
    max_tile_t: seq rows per tile. 1024 fits comfortably in v7x's 64 MiB VMEM;
      v5e/v6e (128 MiB) can use 2048-4096.
    """
    w1, b1, gamma, beta, alpha, w2, b2, w3, b3 = params
    B, _, E = query.shape
    T = user_behavior.shape[1]
    H0 = w1.shape[1]

    # ---- offline weight folding (tiny, plain JAX) --------------------------
    wq, wub, wd, wp = w1[0:E], w1[E:2 * E], w1[2 * E:3 * E], w1[3 * E:4 * E]
    wq_eff = (wq + wd).astype(act_dtype)          # multiplies q
    wub_eff = (wub - wd).astype(act_dtype)        # multiplies ub
    wp_eff = wp.astype(act_dtype)                 # multiplies q*ub
    b1r = b1.reshape(1, H0).astype(jnp.float32)
    w23 = (w2 @ w3).reshape(1, H0).astype(jnp.float32)   # Linear(H0,H1)+fc2 folded
    b23 = (b2 @ w3 + b3).reshape(1, 1).astype(jnp.float32)

    # ---- tiling over the sequence axis --------------------------------------
    tile_t = _round_up(T, 8)
    if tile_t > max_tile_t:
        tile_t = max(128, (max_tile_t // 128) * 128)   # lane-aligned when tiled
    t_pad = _round_up(T, tile_t)
    g_t = t_pad // tile_t

    qa = query.reshape(B, 1, E).astype(act_dtype)
    ub = user_behavior.astype(act_dtype)
    if t_pad != T:
        ub = jnp.pad(ub, ((0, 0), (0, t_pad - T), (0, 0)))

    q_spec = pl.BlockSpec((1, 1, E), lambda b, t: (b, 0, 0))      # reused per batch
    ub_spec = pl.BlockSpec((1, tile_t, E), lambda b, t: (b, t, 0))
    w_spec = pl.BlockSpec((E, H0), lambda b, t: (0, 0))           # resident weights
    row_spec = pl.BlockSpec((1, H0), lambda b, t: (0, 0))
    one_spec = pl.BlockSpec((1, 1), lambda b, t: (0, 0))
    cparams = pltpu.CompilerParams(
        dimension_semantics=("parallel", "parallel"),   # v7x: shard over 2 TCs
        vmem_limit_bytes=32 * 1024 * 1024,
    )

    # ---- pass 1: per-tile Dice/BatchNorm channel statistics ----------------
    stat_shape = jax.ShapeDtypeStruct((B, g_t, 1, H0), jnp.float32)
    stat_spec = pl.BlockSpec((1, 1, 1, H0), lambda b, t: (b, t, 0, 0))
    sums, ssqs = pl.pallas_call(
        functools.partial(_stats_kernel, seq_len=T),
        grid=(B, g_t),
        in_specs=[q_spec, ub_spec, w_spec, w_spec, w_spec, row_spec],
        out_specs=(stat_spec, stat_spec),
        out_shape=(stat_shape, stat_shape),
        compiler_params=cparams,
    )(qa, ub, wq_eff, wub_eff, wp_eff, b1r)

    # ---- tiny [H0] reduction + BN folding in plain JAX ----------------------
    count = jnp.float32(B * T)
    mean = jnp.sum(sums, axis=(0, 1, 2)) / count            # [H0]
    ex2 = jnp.sum(ssqs, axis=(0, 1, 2)) / count
    var = jnp.maximum(ex2 - mean * mean, 0.0)               # biased (training mode)
    rstd = lax.rsqrt(var + DICE_EPS)
    g = gamma.reshape(H0)
    bn_scale = (g * rstd).reshape(1, H0).astype(jnp.float32)
    bn_shift = (beta.reshape(H0) - g * mean * rstd).reshape(1, H0).astype(jnp.float32)
    alpha_r = alpha.reshape(1, H0).astype(jnp.float32)

    # ---- pass 2: fused MLP + Dice + score, lane-dense output ----------------
    out = pl.pallas_call(
        _fwd_kernel,
        grid=(B, g_t),
        in_specs=[q_spec, ub_spec, w_spec, w_spec, w_spec, row_spec,
                  row_spec, row_spec, row_spec, row_spec, one_spec],
        out_specs=pl.BlockSpec((1, 1, 1, tile_t), lambda b, t: (b, t, 0, 0)),
        out_shape=jax.ShapeDtypeStruct((B, g_t, 1, tile_t), jnp.float32),
        compiler_params=cparams,
    )(qa, ub, wq_eff, wub_eff, wp_eff, b1r,
      bn_scale, bn_shift, alpha_r, w23, b23)

    return out.reshape(B, t_pad)[:, :T].reshape(B, T, 1)


# ---------------------------------------------------------------------------
# Parameter init (PyTorch-style) and pure-JAX reference for validation
# ---------------------------------------------------------------------------
def _linear_init(key, fan_in, fan_out):
    kw, kb = jax.random.split(key)
    bound = 1.0 / math.sqrt(fan_in)
    w = jax.random.uniform(kw, (fan_in, fan_out), jnp.float32, -bound, bound)
    b = jax.random.uniform(kb, (1, fan_out), jnp.float32, -bound, bound)
    return w, b


def init_params(key, embedding_dim, hidden_unit=(32, 16)):
    assert len(hidden_unit) == 2, "kernel implements the standard 2-layer fc1 of DIN"
    h0, h1 = hidden_unit
    k1, k2, k3 = jax.random.split(key, 3)
    w1, b1 = _linear_init(k1, 4 * embedding_dim, h0)   # fc1 Linear(4E, H0)
    w2, b2 = _linear_init(k2, h0, h1)                  # fc1 Linear(H0, H1)
    w3, b3 = _linear_init(k3, h1, 1)                   # fc2 Linear(H1, 1)
    gamma = jnp.ones((1, h0), jnp.float32)             # Dice BN weight init
    beta = jnp.zeros((1, h0), jnp.float32)             # Dice BN bias init
    alpha = jnp.zeros((1, h0), jnp.float32)            # Dice alpha init
    return (w1, b1, gamma, beta, alpha, w2, b2, w3, b3)


def _reference_forward(query, user_behavior, params):
    """Unfused pure-JAX transcription of the PyTorch module."""
    w1, b1, gamma, beta, alpha, w2, b2, w3, b3 = params
    B, _, E = query.shape
    T = user_behavior.shape[1]
    hp = lax.Precision.HIGHEST
    q = jnp.broadcast_to(query, (B, T, E))
    x = jnp.concatenate([q, user_behavior, q - user_behavior, q * user_behavior],
                        axis=-1).reshape(B * T, 4 * E)
    h = jnp.dot(x, w1, precision=hp) + b1
    mean = jnp.mean(h, axis=0)
    var = jnp.mean((h - mean) ** 2, axis=0)
    xbn = gamma * ((h - mean) * lax.rsqrt(var + DICE_EPS)) + beta
    p = jax.nn.sigmoid(xbn)
    a = alpha * (1.0 - p) * h + p * h
    h2 = jnp.dot(a, w2, precision=hp) + b2
    score = jnp.dot(h2, w3, precision=hp) + b3
    return score.reshape(B, T, 1)


if __name__ == "__main__":
    B, T, E = 2, 8, 8                 # batch, behavior seq len, embedding_dim
    hidden_unit = (32, 16)

    key = jax.random.PRNGKey(0)
    kq, kub, kp = jax.random.split(key, 3)
    query = jax.random.normal(kq, (B, 1, E), jnp.float32)
    user_behavior = jax.random.normal(kub, (B, T, E), jnp.float32)
    params = init_params(kp, E, hidden_unit)

    fwd = jax.jit(local_activation_unit)
    attention_score = fwd(query, user_behavior, params)
    jax.block_until_ready(attention_score)

    assert attention_score.shape == (B, T, 1)
    assert bool(jnp.all(jnp.isfinite(attention_score)))

    ref = _reference_forward(query, user_behavior, params)
    assert bool(jnp.allclose(attention_score, ref, rtol=5e-2, atol=5e-2)), (
        float(jnp.max(jnp.abs(attention_score - ref))))
    print("KERNEL_OK")
</pallas_src>

<mosaic_0001>
module attributes {stable_mosaic.version = 11 : i64} {
  func.func @_stats_kernel(%arg0: i32, %arg1: i32, %arg2: memref<1x1x8xf32, #tpu.memory_space<vmem>>, %arg3: memref<1x8x8xf32, #tpu.memory_space<vmem>>, %arg4: memref<8x32xf32, #tpu.memory_space<vmem>>, %arg5: memref<8x32xf32, #tpu.memory_space<vmem>>, %arg6: memref<8x32xf32, #tpu.memory_space<vmem>>, %arg7: memref<1x32xf32, #tpu.memory_space<vmem>>, %arg8: memref<1x1x1x32xf32, #tpu.memory_space<vmem>>, %arg9: memref<1x1x1x32xf32, #tpu.memory_space<vmem>>) attributes {dimension_semantics = [#tpu.dimension_semantics<parallel>, #tpu.dimension_semantics<parallel>], iteration_bounds = array<i64: 2, 1>, scalar_prefetch = 0 : i64, scratch_operands = 0 : i64, tpu.core_type = #tpu.core_type<tc>, window_params = [{transform_indices = @transform_0, window_bounds = array<i64: 1, 1, 8>}, {transform_indices = @transform_1, window_bounds = array<i64: 1, 8, 8>}, {pipeline_mode = #tpu.pipeline_mode<synchronous>, transform_indices = @transform_2, window_bounds = array<i64: 8, 32>}, {pipeline_mode = #tpu.pipeline_mode<synchronous>, transform_indices = @transform_3, window_bounds = array<i64: 8, 32>}, {pipeline_mode = #tpu.pipeline_mode<synchronous>, transform_indices = @transform_4, window_bounds = array<i64: 8, 32>}, {pipeline_mode = #tpu.pipeline_mode<synchronous>, transform_indices = @transform_5, window_bounds = array<i64: 1, 32>}, {transform_indices = @transform_6, window_bounds = array<i64: 1, 1, 1, 32>}, {transform_indices = @transform_7, window_bounds = array<i64: 1, 1, 1, 32>}]} {
    %c0 = arith.constant 0 : index
    %c0_0 = arith.constant 0 : index
    %c0_1 = arith.constant 0 : index
    %0 = vector.load %arg2[%c0, %c0_0, %c0_1] : memref<1x1x8xf32, #tpu.memory_space<vmem>>, vector<1x1x8xf32>
    %1 = vector.shape_cast %0 : vector<1x1x8xf32> to vector<1x8xf32>
    %c0_2 = arith.constant 0 : index
    %c0_3 = arith.constant 0 : index
    %c0_4 = arith.constant 0 : index
    %2 = vector.load %arg3[%c0_2, %c0_3, %c0_4] : memref<1x8x8xf32, #tpu.memory_space<vmem>>, vector<1x8x8xf32>
    %3 = vector.shape_cast %2 : vector<1x8x8xf32> to vector<8x8xf32>
    %c0_5 = arith.constant 0 : index
    %c0_6 = arith.constant 0 : index
    %4 = vector.load %arg4[%c0_5, %c0_6] : memref<8x32xf32, #tpu.memory_space<vmem>>, vector<8x32xf32>
    %cst = arith.constant dense<0.000000e+00> : vector<1x32xf32>
    %5 = tpu.matmul %1, %4, %cst {dimension_numbers = #tpu.dot_dimension_numbers<[1], [0], [0], [1], [0, 0, 1, 1], [], []>} : vector<1x8xf32>, vector<8x32xf32>, vector<1x32xf32> -> vector<1x32xf32>
    %c0_7 = arith.constant 0 : index
    %c0_8 = arith.constant 0 : index
    %6 = vector.load %arg5[%c0_7, %c0_8] : memref<8x32xf32, #tpu.memory_space<vmem>>, vector<8x32xf32>
    %cst_9 = arith.constant dense<0.000000e+00> : vector<8x32xf32>
    %7 = tpu.matmul %3, %6, %cst_9 {dimension_numbers = #tpu.dot_dimension_numbers<[1], [0], [0], [1], [0, 0, 1, 1], [], []>} : vector<8x8xf32>, vector<8x32xf32>, vector<8x32xf32> -> vector<8x32xf32>
    %8 = vector.broadcast %5 : vector<1x32xf32> to vector<8x32xf32>
    %9 = arith.addf %8, %7 : vector<8x32xf32>
    %10 = vector.broadcast %1 : vector<1x8xf32> to vector<8x8xf32>
    %11 = arith.mulf %10, %3 : vector<8x8xf32>
    %c0_10 = arith.constant 0 : index
    %c0_11 = arith.constant 0 : index
    %12 = vector.load %arg6[%c0_10, %c0_11] : memref<8x32xf32, #tpu.memory_space<vmem>>, vector<8x32xf32>
    %cst_12 = arith.constant dense<0.000000e+00> : vector<8x32xf32>
    %13 = tpu.matmul %11, %12, %cst_12 {dimension_numbers = #tpu.dot_dimension_numbers<[1], [0], [0], [1], [0, 0, 1, 1], [], []>} : vector<8x8xf32>, vector<8x32xf32>, vector<8x32xf32> -> vector<8x32xf32>
    %14 = arith.addf %9, %13 : vector<8x32xf32>
    %c0_13 = arith.constant 0 : index
    %c0_14 = arith.constant 0 : index
    %15 = vector.load %arg7[%c0_13, %c0_14] : memref<1x32xf32, #tpu.memory_space<vmem>>, vector<1x32xf32>
    %16 = vector.broadcast %15 : vector<1x32xf32> to vector<8x32xf32>
    %17 = arith.addf %14, %16 : vector<8x32xf32>
    %18 = tpu.iota {dimensions = array<i32: 0>} : vector<8x1xi32>
    %c8_i32 = arith.constant 8 : i32
    %19 = arith.muli %arg1, %c8_i32 : i32
    %20 = vector.broadcast %19 : i32 to vector<8x1xi32>
    %21 = arith.addi %18, %20 : vector<8x1xi32>
    %c8_i32_15 = arith.constant 8 : i32
    %22 = vector.broadcast %c8_i32_15 : i32 to vector<8x1xi32>
    %23 = arith.cmpi slt, %21, %22 : vector<8x1xi32>
    %24 = arith.extui %23 : vector<8x1xi1> to vector<8x1xi32>
    %25 = arith.sitofp %24 : vector<8x1xi32> to vector<8x1xf32>
    %26 = vector.broadcast %25 : vector<8x1xf32> to vector<8x32xf32>
    %27 = arith.mulf %17, %26 : vector<8x32xf32>
    %cst_16 = arith.constant dense<0.000000e+00> : vector<32xf32>
    %28 = vector.multi_reduction <add>, %27, %cst_16 [0] : vector<8x32xf32> to vector<32xf32>
    %29 = vector.shape_cast %28 : vector<32xf32> to vector<1x32xf32>
    %30 = vector.shape_cast %29 : vector<1x32xf32> to vector<1x1x1x32xf32>
    %c0_17 = arith.constant 0 : index
    %c0_18 = arith.constant 0 : index
    %c0_19 = arith.constant 0 : index
    %c0_20 = arith.constant 0 : index
    %31 = vector.load %arg8[%c0_17, %c0_18, %c0_19, %c0_20] : memref<1x1x1x32xf32, #tpu.memory_space<vmem>>, vector<1x1x1x32xf32>
    tpu.vector_store %arg8[%c0_17, %c0_18, %c0_19, %c0_20], %30 {strides = array<i32>} : memref<1x1x1x32xf32, #tpu.memory_space<vmem>>, vector<1x1x1x32xf32>,
    %32 = arith.mulf %27, %17 : vector<8x32xf32>
    %cst_21 = arith.constant dense<0.000000e+00> : vector<32xf32>
    %33 = vector.multi_reduction <add>, %32, %cst_21 [0] : vector<8x32xf32> to vector<32xf32>
    %34 = vector.shape_cast %33 : vector<32xf32> to vector<1x32xf32>
    %35 = vector.shape_cast %34 : vector<1x32xf32> to vector<1x1x1x32xf32>
    %c0_22 = arith.constant 0 : index
    %c0_23 = arith.constant 0 : index
    %c0_24 = arith.constant 0 : index
    %c0_25 = arith.constant 0 : index
    %36 = vector.load %arg9[%c0_22, %c0_23, %c0_24, %c0_25] : memref<1x1x1x32xf32, #tpu.memory_space<vmem>>, vector<1x1x1x32xf32>
    tpu.vector_store %arg9[%c0_22, %c0_23, %c0_24, %c0_25], %35 {strides = array<i32>} : memref<1x1x1x32xf32, #tpu.memory_space<vmem>>, vector<1x1x1x32xf32>,
    return
  }
  func.func @transform_0(%arg0: i32, %arg1: i32) -> (i32, i32, i32) {
    %c0_i32 = arith.constant 0 : i32
    %c0_i32_0 = arith.constant 0 : i32
    %c0_i32_1 = arith.constant 0 : i32
    return %arg0, %c0_i32, %c0_i32_0 : i32, i32, i32
  }
  func.func @transform_1(%arg0: i32, %arg1: i32) -> (i32, i32, i32) {
    %c0_i32 = arith.constant 0 : i32
    %c0_i32_0 = arith.constant 0 : i32
    return %arg0, %arg1, %c0_i32 : i32, i32, i32
  }
  func.func @transform_2(%arg0: i32, %arg1: i32) -> (i32, i32) {
    %c0_i32 = arith.constant 0 : i32
    %c0_i32_0 = arith.constant 0 : i32
    %c0_i32_1 = arith.constant 0 : i32
    return %c0_i32, %c0_i32_0 : i32, i32
  }
  func.func @transform_3(%arg0: i32, %arg1: i32) -> (i32, i32) {
    %c0_i32 = arith.constant 0 : i32
    %c0_i32_0 = arith.constant 0 : i32
    %c0_i32_1 = arith.constant 0 : i32
    return %c0_i32, %c0_i32_0 : i32, i32
  }
  func.func @transform_4(%arg0: i32, %arg1: i32) -> (i32, i32) {
    %c0_i32 = arith.constant 0 : i32
    %c0_i32_0 = arith.constant 0 : i32
    %c0_i32_1 = arith.constant 0 : i32
    return %c0_i32, %c0_i32_0 : i32, i32
  }
  func.func @transform_5(%arg0: i32, %arg1: i32) -> (i32, i32) {
    %c0_i32 = arith.constant 0 : i32
    %c0_i32_0 = arith.constant 0 : i32
    %c0_i32_1 = arith.constant 0 : i32
    return %c0_i32, %c0_i32_0 : i32, i32
  }
  func.func @transform_6(%arg0: i32, %arg1: i32) -> (i32, i32, i32, i32) {
    %c0_i32 = arith.constant 0 : i32
    %c0_i32_0 = arith.constant 0 : i32
    %c0_i32_1 = arith.constant 0 : i32
    return %arg0, %arg1, %c0_i32, %c0_i32_0 : i32, i32, i32, i32
  }
  func.func @transform_7(%arg0: i32, %arg1: i32) -> (i32, i32, i32, i32) {
    %c0_i32 = arith.constant 0 : i32
    %c0_i32_0 = arith.constant 0 : i32
    %c0_i32_1 = arith.constant 0 : i32
    return %arg0, %arg1, %c0_i32, %c0_i32_0 : i32, i32, i32, i32
  }
}

module attributes {stable_mosaic.version = 11 : i64} {
  func.func @_fwd_kernel(%arg0: i32, %arg1: i32, %arg2: memref<1x1x8xf32, #tpu.memory_space<vmem>>, %arg3: memref<1x8x8xf32, #tpu.memory_space<vmem>>, %arg4: memref<8x32xf32, #tpu.memory_space<vmem>>, %arg5: memref<8x32xf32, #tpu.memory_space<vmem>>, %arg6: memref<8x32xf32, #tpu.memory_space<vmem>>, %arg7: memref<1x32xf32, #tpu.memory_space<vmem>>, %arg8: memref<1x32xf32, #tpu.memory_space<vmem>>, %arg9: memref<1x32xf32, #tpu.memory_space<vmem>>, %arg10: memref<1x32xf32, #tpu.memory_space<vmem>>, %arg11: memref<1x32xf32, #tpu.memory_space<vmem>>, %arg12: memref<1x1xf32, #tpu.memory_space<vmem>>, %arg13: memref<1x1x1x8xf32, #tpu.memory_space<vmem>>) attributes {dimension_semantics = [#tpu.dimension_semantics<parallel>, #tpu.dimension_semantics<parallel>], iteration_bounds = array<i64: 2, 1>, scalar_prefetch = 0 : i64, scratch_operands = 0 : i64, tpu.core_type = #tpu.core_type<tc>, window_params = [{transform_indices = @transform_0, window_bounds = array<i64: 1, 1, 8>}, {transform_indices = @transform_1, window_bounds = array<i64: 1, 8, 8>}, {pipeline_mode = #tpu.pipeline_mode<synchronous>, transform_indices = @transform_2, window_bounds = array<i64: 8, 32>}, {pipeline_mode = #tpu.pipeline_mode<synchronous>, transform_indices = @transform_3, window_bounds = array<i64: 8, 32>}, {pipeline_mode = #tpu.pipeline_mode<synchronous>, transform_indices = @transform_4, window_bounds = array<i64: 8, 32>}, {pipeline_mode = #tpu.pipeline_mode<synchronous>, transform_indices = @transform_5, window_bounds = array<i64: 1, 32>}, {pipeline_mode = #tpu.pipeline_mode<synchronous>, transform_indices = @transform_6, window_bounds = array<i64: 1, 32>}, {pipeline_mode = #tpu.pipeline_mode<synchronous>, transform_indices = @transform_7, window_bounds = array<i64: 1, 32>}, {pipeline_mode = #tpu.pipeline_mode<synchronous>, transform_indices = @transform_8, window_bounds = array<i64: 1, 32>}, {pipeline_mode = #tpu.pipeline_mode<synchronous>, transform_indices = @transform_9, window_bounds = array<i64: 1, 32>}, {pipeline_mode = #tpu.pipeline_mode<synchronous>, transform_indices = @transform_10, window_bounds = array<i64: 1, 1>}, {transform_indices = @transform_11, window_bounds = array<i64: 1, 1, 1, 8>}]} {
    %c0 = arith.constant 0 : index
    %c0_0 = arith.constant 0 : index
    %c0_1 = arith.constant 0 : index
    %0 = vector.load %arg2[%c0, %c0_0, %c0_1] : memref<1x1x8xf32, #tpu.memory_space<vmem>>, vector<1x1x8xf32>
    %1 = vector.shape_cast %0 : vector<1x1x8xf32> to vector<1x8xf32>
    %c0_2 = arith.constant 0 : index
    %c0_3 = arith.constant 0 : index
    %c0_4 = arith.constant 0 : index
    %2 = vector.load %arg3[%c0_2, %c0_3, %c0_4] : memref<1x8x8xf32, #tpu.memory_space<vmem>>, vector<1x8x8xf32>
    %3 = vector.shape_cast %2 : vector<1x8x8xf32> to vector<8x8xf32>
    %c0_5 = arith.constant 0 : index
    %c0_6 = arith.constant 0 : index
    %4 = vector.load %arg4[%c0_5, %c0_6] : memref<8x32xf32, #tpu.memory_space<vmem>>, vector<8x32xf32>
    %cst = arith.constant dense<0.000000e+00> : vector<1x32xf32>
    %5 = tpu.matmul %1, %4, %cst {dimension_numbers = #tpu.dot_dimension_numbers<[1], [0], [0], [1], [0, 0, 1, 1], [], []>} : vector<1x8xf32>, vector<8x32xf32>, vector<1x32xf32> -> vector<1x32xf32>
    %c0_7 = arith.constant 0 : index
    %c0_8 = arith.constant 0 : index
    %6 = vector.load %arg5[%c0_7, %c0_8] : memref<8x32xf32, #tpu.memory_space<vmem>>, vector<8x32xf32>
    %cst_9 = arith.constant dense<0.000000e+00> : vector<8x32xf32>
    %7 = tpu.matmul %3, %6, %cst_9 {dimension_numbers = #tpu.dot_dimension_numbers<[1], [0], [0], [1], [0, 0, 1, 1], [], []>} : vector<8x8xf32>, vector<8x32xf32>, vector<8x32xf32> -> vector<8x32xf32>
    %8 = vector.broadcast %5 : vector<1x32xf32> to vector<8x32xf32>
    %9 = arith.addf %8, %7 : vector<8x32xf32>
    %10 = vector.broadcast %1 : vector<1x8xf32> to vector<8x8xf32>
    %11 = arith.mulf %10, %3 : vector<8x8xf32>
    %c0_10 = arith.constant 0 : index
    %c0_11 = arith.constant 0 : index
    %12 = vector.load %arg6[%c0_10, %c0_11] : memref<8x32xf32, #tpu.memory_space<vmem>>, vector<8x32xf32>
    %cst_12 = arith.constant dense<0.000000e+00> : vector<8x32xf32>
    %13 = tpu.matmul %11, %12, %cst_12 {dimension_numbers = #tpu.dot_dimension_numbers<[1], [0], [0], [1], [0, 0, 1, 1], [], []>} : vector<8x8xf32>, vector<8x32xf32>, vector<8x32xf32> -> vector<8x32xf32>
    %14 = arith.addf %9, %13 : vector<8x32xf32>
    %c0_13 = arith.constant 0 : index
    %c0_14 = arith.constant 0 : index
    %15 = vector.load %arg7[%c0_13, %c0_14] : memref<1x32xf32, #tpu.memory_space<vmem>>, vector<1x32xf32>
    %16 = vector.broadcast %15 : vector<1x32xf32> to vector<8x32xf32>
    %17 = arith.addf %14, %16 : vector<8x32xf32>
    %c0_15 = arith.constant 0 : index
    %c0_16 = arith.constant 0 : index
    %18 = vector.load %arg8[%c0_15, %c0_16] : memref<1x32xf32, #tpu.memory_space<vmem>>, vector<1x32xf32>
    %19 = vector.broadcast %18 : vector<1x32xf32> to vector<8x32xf32>
    %20 = arith.mulf %17, %19 : vector<8x32xf32>
    %c0_17 = arith.constant 0 : index
    %c0_18 = arith.constant 0 : index
    %21 = vector.load %arg9[%c0_17, %c0_18] : memref<1x32xf32, #tpu.memory_space<vmem>>, vector<1x32xf32>
    %22 = vector.broadcast %21 : vector<1x32xf32> to vector<8x32xf32>
    %23 = arith.addf %20, %22 : vector<8x32xf32>
    %24 = arith.negf %23 : vector<8x32xf32>
    %25 = math.exp %24 : vector<8x32xf32>
    %cst_19 = arith.constant 1.000000e+00 : f32
    %26 = vector.broadcast %cst_19 : f32 to vector<8x32xf32>
    %27 = arith.addf %26, %25 : vector<8x32xf32>
    %28 = arith.divf %26, %27 : vector<8x32xf32>
    %c0_20 = arith.constant 0 : index
    %c0_21 = arith.constant 0 : index
    %29 = vector.load %arg10[%c0_20, %c0_21] : memref<1x32xf32, #tpu.memory_space<vmem>>, vector<1x32xf32>
    %cst_22 = arith.constant 1.000000e+00 : f32
    %30 = vector.broadcast %cst_22 : f32 to vector<8x32xf32>
    %31 = arith.subf %30, %28 : vector<8x32xf32>
    %32 = vector.broadcast %29 : vector<1x32xf32> to vector<8x32xf32>
    %33 = arith.mulf %32, %31 : vector<8x32xf32>
    %34 = arith.addf %28, %33 : vector<8x32xf32>
    %35 = arith.mulf %17, %34 : vector<8x32xf32>
    %c0_23 = arith.constant 0 : index
    %c0_24 = arith.constant 0 : index
    %36 = vector.load %arg11[%c0_23, %c0_24] : memref<1x32xf32, #tpu.memory_space<vmem>>, vector<1x32xf32>
    %cst_25 = arith.constant dense<0.000000e+00> : vector<1x8xf32>
    %37 = tpu.matmul %36, %35, %cst_25 {dimension_numbers = #tpu.dot_dimension_numbers<[1], [1], [0], [0], [0, 0, 1, 0], [], []>} : vector<1x32xf32>, vector<8x32xf32>, vector<1x8xf32> -> vector<1x8xf32>
    %c0_26 = arith.constant 0 : index
    %c0_27 = arith.constant 0 : index
    %38 = vector.load %arg12[%c0_26, %c0_27] : memref<1x1xf32, #tpu.memory_space<vmem>>, vector<1x1xf32>
    %39 = vector.broadcast %38 : vector<1x1xf32> to vector<1x8xf32>
    %40 = arith.addf %37, %39 : vector<1x8xf32>
    %41 = vector.shape_cast %40 : vector<1x8xf32> to vector<1x1x1x8xf32>
    %c0_28 = arith.constant 0 : index
    %c0_29 = arith.constant 0 : index
    %c0_30 = arith.constant 0 : index
    %c0_31 = arith.constant 0 : index
    %42 = vector.load %arg13[%c0_28, %c0_29, %c0_30, %c0_31] : memref<1x1x1x8xf32, #tpu.memory_space<vmem>>, vector<1x1x1x8xf32>
    tpu.vector_store %arg13[%c0_28, %c0_29, %c0_30, %c0_31], %41 {strides = array<i32>} : memref<1x1x1x8xf32, #tpu.memory_space<vmem>>, vector<1x1x1x8xf32>,
    return
  }
  func.func @transform_0(%arg0: i32, %arg1: i32) -> (i32, i32, i32) {
    %c0_i32 = arith.constant 0 : i32
    %c0_i32_0 = arith.constant 0 : i32
    %c0_i32_1 = arith.constant 0 : i32
    return %arg0, %c0_i32, %c0_i32_0 : i32, i32, i32
  }
  func.func @transform_1(%arg0: i32, %arg1: i32) -> (i32, i32, i32) {
    %c0_i32 = arith.constant 0 : i32
    %c0_i32_0 = arith.constant 0 : i32
    return %arg0, %arg1, %c0_i32 : i32, i32, i32
  }
  func.func @transform_2(%arg0: i32, %arg1: i32) -> (i32, i32) {
    %c0_i32 = arith.constant 0 : i32
    %c0_i32_0 = arith.constant 0 : i32
    %c0_i32_1 = arith.constant 0 : i32
    return %c0_i32, %c0_i32_0 : i32, i32
  }
  func.func @transform_3(%arg0: i32, %arg1: i32) -> (i32, i32) {
    %c0_i32 = arith.constant 0 : i32
    %c0_i32_0 = arith.constant 0 : i32
    %c0_i32_1 = arith.constant 0 : i32
    return %c0_i32, %c0_i32_0 : i32, i32
  }
  func.func @transform_4(%arg0: i32, %arg1: i32) -> (i32, i32) {
    %c0_i32 = arith.constant 0 : i32
    %c0_i32_0 = arith.constant 0 : i32
    %c0_i32_1 = arith.constant 0 : i32
    return %c0_i32, %c0_i32_0 : i32, i32
  }
  func.func @transform_5(%arg0: i32, %arg1: i32) -> (i32, i32) {
    %c0_i32 = arith.constant 0 : i32
    %c0_i32_0 = arith.constant 0 : i32
    %c0_i32_1 = arith.constant 0 : i32
    return %c0_i32, %c0_i32_0 : i32, i32
  }
  func.func @transform_6(%arg0: i32, %arg1: i32) -> (i32, i32) {
    %c0_i32 = arith.constant 0 : i32
    %c0_i32_0 = arith.constant 0 : i32
    %c0_i32_1 = arith.constant 0 : i32
    return %c0_i32, %c0_i32_0 : i32, i32
  }
  func.func @transform_7(%arg0: i32, %arg1: i32) -> (i32, i32) {
    %c0_i32 = arith.constant 0 : i32
    %c0_i32_0 = arith.constant 0 : i32
    %c0_i32_1 = arith.constant 0 : i32
    return %c0_i32, %c0_i32_0 : i32, i32
  }
  func.func @transform_8(%arg0: i32, %arg1: i32) -> (i32, i32) {
    %c0_i32 = arith.constant 0 : i32
    %c0_i32_0 = arith.constant 0 : i32
    %c0_i32_1 = arith.constant 0 : i32
    return %c0_i32, %c0_i32_0 : i32, i32
  }
  func.func @transform_9(%arg0: i32, %arg1: i32) -> (i32, i32) {
    %c0_i32 = arith.constant 0 : i32
    %c0_i32_0 = arith.constant 0 : i32
    %c0_i32_1 = arith.constant 0 : i32
    return %c0_i32, %c0_i32_0 : i32, i32
  }
  func.func @transform_10(%arg0: i32, %arg1: i32) -> (i32, i32) {
    %c0_i32 = arith.constant 0 : i32
    %c0_i32_0 = arith.constant 0 : i32
    %c0_i32_1 = arith.constant 0 : i32
    return %c0_i32, %c0_i32_0 : i32, i32
  }
  func.func @transform_11(%arg0: i32, %arg1: i32) -> (i32, i32, i32, i32) {
    %c0_i32 = arith.constant 0 : i32
    %c0_i32_0 = arith.constant 0 : i32
    %c0_i32_1 = arith.constant 0 : i32
    return %arg0, %arg1, %c0_i32, %c0_i32_0 : i32, i32, i32, i32
  }
}

</mosaic_0001>

<llo_original>
// kernel: local_activation_unit.2
$region0: #{local_activation_unit.2}
  #allocation0 [shape = 'u32[]', space=smem, size = 0x4, offset = 0x4, fixed_abs, tag = 'smem constant byte address 0x4 - core index']
  #allocation1 [shape = 'u32[72,128]{1,0:T(1,128)}', space=vmem, size = 0x9000, scoped, tag = 'internal scratch']
  %s0 = inlined_call_operand.vmem [shape: f32[2,1,8], index: 0, kind: input, shape index: {}]
  %s1 = inlined_call_operand.vmem [shape: f32[2,8,8], index: 1, kind: input, shape index: {}]
  %s2 = inlined_call_operand.vmem [shape: f32[8,32], index: 2, kind: input, shape index: {}]
  %s3 = inlined_call_operand.vmem [shape: f32[8,32], index: 3, kind: input, shape index: {}]
  %s4 = inlined_call_operand.vmem [shape: f32[8,32], index: 4, kind: input, shape index: {}]
  %s5 = inlined_call_operand.vmem [shape: f32[1,32], index: 5, kind: input, shape index: {}]
  %s6 = inlined_call_operand.vmem [shape: f32[2,1,1,32], index: 6, kind: output, shape index: {0}]
  %s7 = inlined_call_operand.vmem [shape: f32[2,1,1,32], index: 7, kind: output, shape index: {1}]
  %8 = xla_tuple %s6, %s7
  %s9 = sld [smem:[#allocation0]]
  $region65: #{local_activation_unit.2} parent=0
    _
  %s11 = ssub.s32 1, %s9
  %s12 = scalar_select 0, %s11, %s9
  loop: start=0, step=1, limit=4
  $region2: #{local_activation_unit.2} parent=0 // loop_pre_header
    _
  $region3: #{local_activation_unit.2} parent=0 // loop_header
    %s14 = sphi 0, %s18
    %p15 = scmp.ge.s32.totalorder %s14, 4
    %s21 = sphi 0, %s33
    %s22 = sphi 0, %s29
    %s23 = sphi 0, %s21
    %s24 = sphi 0, %s22
    %s25 = sphi 0, %s23
    %s26 = sphi 0, %s24
    %s36 = sphi 0, %s38
    %s39 = sphi 0, %s36
    %s40 = sphi 0, %s39
    %s56 = sphi 0, %s40
    %s64 = sphi 0, %s66
    %s67 = sphi 0, %s64
    %s68 = sphi 0, %s67
    %s84 = sphi 0, %s68
    %s88 = sphi 0, %s88
    %s90 = sphi 0, %s88
    %s91 = sphi 0, %s90
    %s105 = sphi 0, %s91
    %s109 = sphi 0, %s109
    %s111 = sphi 0, %s109
    %s112 = sphi 0, %s111
    %s126 = sphi 0, %s112
    %s130 = sphi 0, %s130
    %s132 = sphi 0, %s130
    %s133 = sphi 0, %s132
    %s147 = sphi 0, %s133
    %s151 = sphi 0, %s151
    %s153 = sphi 0, %s151
    %s154 = sphi 0, %s153
    %s168 = sphi 0, %s154
    %s176 = sphi 0, %s178
    %s179 = sphi 0, %s176
    %s180 = sphi 0, %s179
    %s196 = sphi 0, %s180
    %s204 = sphi 0, %s206
    %s207 = sphi 0, %s204
    %s208 = sphi 0, %s207
    %s224 = sphi 0, %s208
  $region4: #{local_activation_unit.2} parent=0 // loop_header_branch
    %17 = sbr.rel (%p15) target = $region8
  $region5: #{local_activation_unit.2} parent=0 // loop_body
    %s19 = ssub.s32 %s14, 1
    %s20 = ssub.s32 %s14, 2
    %s27 = sadd.s32 1, %s22
    %p28 = scmp.ge.s32.totalorder %s27, 1
    %s29 = scalar_select %p28, 0, %s27
    %s30 = sadd.s32 1, %s21
    %s31 = scalar_select %p28, %s30, %s21
    %p32 = scmp.ge.s32.totalorder %s31, 2
    %s33 = scalar_select %p32, 0, %s31
    %s34 = ssub.s32 %s21, %s33
    %p35 = scmp.eq.s32.totalorder %s34, 0
    %s37 = sadd.s32 %s36, 1
    %s38 = scalar_select %p35, %s36, %s37
    %p41 = pneg %p35
    %p42 = scmp.eq.s32.totalorder %s14, 1
    %p43 = por %p41, %p42
    %p44 = scmp.ne.s32.totalorder %s36, %s39
    %p45 = scmp.eq.s32.totalorder %s14, 0
    %p46 = por %p44, %p45
    %p47 = scmp.ne.s32.totalorder %s36, %s39
    %p48 = scmp.eq.s32.totalorder %s19, 1
    %p49 = por %p47, %p48
    %p50 = scmp.ne.s32.totalorder %s39, %s40
    %p51 = scmp.eq.s32.totalorder %s19, 0
    %p52 = por %p50, %p51
    %p53 = scmp.ne.s32.totalorder %s39, %s40
    %p54 = scmp.eq.s32.totalorder %s20, 1
    %p55 = por %p53, %p54
    %p57 = scmp.ne.s32.totalorder %s40, %s56
    %p58 = scmp.eq.s32.totalorder %s20, 0
    %p59 = por %p57, %p58
    %s60 = ssub.s32 %s21, %s33
    %s61 = ssub.s32 %s22, %s29
    %s62 = sor.u32 %s60, %s61
    %p63 = scmp.eq.s32.totalorder %s62, 0
    %s65 = sadd.s32 %s64, 1
    %s66 = scalar_select %p63, %s64, %s65
    %p69 = pneg %p63
    %p70 = scmp.eq.s32.totalorder %s14, 1
    %p71 = por %p69, %p70
    %p72 = scmp.ne.s32.totalorder %s64, %s67
    %p73 = scmp.eq.s32.totalorder %s14, 0
    %p74 = por %p72, %p73
    %p75 = scmp.ne.s32.totalorder %s64, %s67
    %p76 = scmp.eq.s32.totalorder %s19, 1
    %p77 = por %p75, %p76
    %p78 = scmp.ne.s32.totalorder %s67, %s68
    %p79 = scmp.eq.s32.totalorder %s19, 0
    %p80 = por %p78, %p79
    %p81 = scmp.ne.s32.totalorder %s67, %s68
    %p82 = scmp.eq.s32.totalorder %s20, 1
    %p83 = por %p81, %p82
    %p85 = scmp.ne.s32.totalorder %s68, %s84
    %p86 = scmp.eq.s32.totalorder %s20, 0
    %p87 = por %p85, %p86
    %s89 = sadd.s32 %s88, 1
    %p92 = scmp.eq.s32.totalorder %s14, 1
    %p93 = scmp.ne.s32.totalorder %s88, %s90
    %p94 = scmp.eq.s32.totalorder %s14, 0
    %p95 = por %p93, %p94
    %p96 = scmp.ne.s32.totalorder %s88, %s90
    %p97 = scmp.eq.s32.totalorder %s19, 1
    %p98 = por %p96, %p97
    %p99 = scmp.ne.s32.totalorder %s90, %s91
    %p100 = scmp.eq.s32.totalorder %s19, 0
    %p101 = por %p99, %p100
    %p102 = scmp.ne.s32.totalorder %s90, %s91
    %p103 = scmp.eq.s32.totalorder %s20, 1
    %p104 = por %p102, %p103
    %p106 = scmp.ne.s32.totalorder %s91, %s105
    %p107 = scmp.eq.s32.totalorder %s20, 0
    %p108 = por %p106, %p107
    %s110 = sadd.s32 %s109, 1
    %p113 = scmp.eq.s32.totalorder %s14, 1
    %p114 = scmp.ne.s32.totalorder %s109, %s111
    %p115 = scmp.eq.s32.totalorder %s14, 0
    %p116 = por %p114, %p115
    %p117 = scmp.ne.s32.totalorder %s109, %s111
    %p118 = scmp.eq.s32.totalorder %s19, 1
    %p119 = por %p117, %p118
    %p120 = scmp.ne.s32.totalorder %s111, %s112
    %p121 = scmp.eq.s32.totalorder %s19, 0
    %p122 = por %p120, %p121
    %p123 = scmp.ne.s32.totalorder %s111, %s112
    %p124 = scmp.eq.s32.totalorder %s20, 1
    %p125 = por %p123, %p124
    %p127 = scmp.ne.s32.totalorder %s112, %s126
    %p128 = scmp.eq.s32.totalorder %s20, 0
    %p129 = por %p127, %p128
    %s131 = sadd.s32 %s130, 1
    %p134 = scmp.eq.s32.totalorder %s14, 1
    %p135 = scmp.ne.s32.totalorder %s130, %s132
    %p136 = scmp.eq.s32.totalorder %s14, 0
    %p137 = por %p135, %p136
    %p138 = scmp.ne.s32.totalorder %s130, %s132
    %p139 = scmp.eq.s32.totalorder %s19, 1
    %p140 = por %p138, %p139
    %p141 = scmp.ne.s32.totalorder %s132, %s133
    %p142 = scmp.eq.s32.totalorder %s19, 0
    %p143 = por %p141, %p142
    %p144 = scmp.ne.s32.totalorder %s132, %s133
    %p145 = scmp.eq.s32.totalorder %s20, 1
    %p146 = por %p144, %p145
    %p148 = scmp.ne.s32.totalorder %s133, %s147
    %p149 = scmp.eq.s32.totalorder %s20, 0
    %p150 = por %p148, %p149
    %s152 = sadd.s32 %s151, 1
    %p155 = scmp.eq.s32.totalorder %s14, 1
    %p156 = scmp.ne.s32.totalorder %s151, %s153
    %p157 = scmp.eq.s32.totalorder %s14, 0
    %p158 = por %p156, %p157
    %p159 = scmp.ne.s32.totalorder %s151, %s153
    %p160 = scmp.eq.s32.totalorder %s19, 1
    %p161 = por %p159, %p160
    %p162 = scmp.ne.s32.totalorder %s153, %s154
    %p163 = scmp.eq.s32.totalorder %s19, 0
    %p164 = por %p162, %p163
    %p165 = scmp.ne.s32.totalorder %s153, %s154
    %p166 = scmp.eq.s32.totalorder %s20, 1
    %p167 = por %p165, %p166
    %p169 = scmp.ne.s32.totalorder %s154, %s168
    %p170 = scmp.eq.s32.totalorder %s20, 0
    %p171 = por %p169, %p170
    %s172 = ssub.s32 %s21, %s33
    %s173 = ssub.s32 %s22, %s29
    %s174 = sor.u32 %s172, %s173
    %p175 = scmp.eq.s32.totalorder %s174, 0
    %s177 = sadd.s32 %s176, 1
    %s178 = scalar_select %p175, %s176, %s177
    %p181 = pneg %p175
    %p182 = scmp.eq.s32.totalorder %s14, 1
    %p183 = por %p181, %p182
    %p184 = scmp.ne.s32.totalorder %s176, %s179
    %p185 = scmp.eq.s32.totalorder %s14, 0
    %p186 = por %p184, %p185
    %p187 = scmp.ne.s32.totalorder %s176, %s179
    %p188 = scmp.eq.s32.totalorder %s19, 1
    %p189 = por %p187, %p188
    %p190 = scmp.ne.s32.totalorder %s179, %s180
    %p191 = scmp.eq.s32.totalorder %s19, 0
    %p192 = por %p190, %p191
    %p193 = scmp.ne.s32.totalorder %s179, %s180
    %p194 = scmp.eq.s32.totalorder %s20, 1
    %p195 = por %p193, %p194
    %p197 = scmp.ne.s32.totalorder %s180, %s196
    %p198 = scmp.eq.s32.totalorder %s20, 0
    %p199 = por %p197, %p198
    %s200 = ssub.s32 %s21, %s33
    %s201 = ssub.s32 %s22, %s29
    %s202 = sor.u32 %s200, %s201
    %p203 = scmp.eq.s32.totalorder %s202, 0
    %s205 = sadd.s32 %s204, 1
    %s206 = scalar_select %p203, %s204, %s205
    %p209 = pneg %p203
    %p210 = scmp.eq.s32.totalorder %s14, 1
    %p211 = por %p209, %p210
    %p212 = scmp.ne.s32.totalorder %s204, %s207
    %p213 = scmp.eq.s32.totalorder %s14, 0
    %p214 = por %p212, %p213
    %p215 = scmp.ne.s32.totalorder %s204, %s207
    %p216 = scmp.eq.s32.totalorder %s19, 1
    %p217 = por %p215, %p216
    %p218 = scmp.ne.s32.totalorder %s207, %s208
    %p219 = scmp.eq.s32.totalorder %s19, 0
    %p220 = por %p218, %p219
    %p221 = scmp.ne.s32.totalorder %s207, %s208
    %p222 = scmp.eq.s32.totalorder %s20, 1
    %p223 = por %p221, %p222
    %p225 = scmp.ne.s32.totalorder %s208, %s224
    %p226 = scmp.eq.s32.totalorder %s20, 0
    %p227 = por %p225, %p226
    %p228 = scmp.le.s32.totalorder 1, %s14
    %p229 = scmp.lt.s32.totalorder %s14, 3
    %p230 = pnand %p228, %p229
    %p231 = pneg %p230
    // Predicated region
    $region9: #{local_activation_unit.2} parent=5 // pred_check
      _
    $region10: #{local_activation_unit.2} parent=5 // pred_check_branch
      %233 = sbr.rel (%p230) target = $region12
    $region11: #{local_activation_unit.2} parent=5 // pred_region
      %s234 = ssub.s32 %s14, 1
      // Predicated region
      $region13: #{local_activation_unit.2} parent=11 // pred_check
        %p235 = pneg %p101
      $region14: #{local_activation_unit.2} parent=11 // pred_check_branch
        %237 = sbr.rel (%p235) target = $region16
      $region15: #{local_activation_unit.2} parent=11 // pred_region
        _
      $region16: #{local_activation_unit.2} parent=11 // pred_fallthru
        _
      // Predicated region
      $region17: #{local_activation_unit.2} parent=11 // pred_check
        %p238 = pneg %p122
      $region18: #{local_activation_unit.2} parent=11 // pred_check_branch
        %240 = sbr.rel (%p238) target = $region20
      $region19: #{local_activation_unit.2} parent=11 // pred_region
        _
      $region20: #{local_activation_unit.2} parent=11 // pred_fallthru
        _
      // Predicated region
      $region21: #{local_activation_unit.2} parent=11 // pred_check
        %p241 = pneg %p143
      $region22: #{local_activation_unit.2} parent=11 // pred_check_branch
        %243 = sbr.rel (%p241) target = $region24
      $region23: #{local_activation_unit.2} parent=11 // pred_region
        _
      $region24: #{local_activation_unit.2} parent=11 // pred_fallthru
        _
      // Predicated region
      $region25: #{local_activation_unit.2} parent=11 // pred_check
        %p244 = pneg %p164
      $region26: #{local_activation_unit.2} parent=11 // pred_check_branch
        %246 = sbr.rel (%p244) target = $region28
      $region27: #{local_activation_unit.2} parent=11 // pred_region
        _
      $region28: #{local_activation_unit.2} parent=11 // pred_fallthru
        _
    $region12: #{local_activation_unit.2} parent=5 // pred_fallthru
      _
    %p247 = scmp.lt.s32.totalorder %s14, 2
    // Predicated region
    $region29: #{local_activation_unit.2} parent=5 // pred_check
      %p248 = pneg %p247
    $region30: #{local_activation_unit.2} parent=5 // pred_check_branch
      %250 = sbr.rel (%p248) target = $region32
    $region31: #{local_activation_unit.2} parent=5 // pred_region
      // Predicated region
      $region33: #{local_activation_unit.2} parent=31 // pred_check
        %p251 = pneg %p46
      $region34: #{local_activation_unit.2} parent=31 // pred_check_branch
        %253 = sbr.rel (%p251) target = $region36
      $region35: #{local_activation_unit.2} parent=31 // pred_region
        %p254 = scmp.lt.s32.totalorder %s21, 1
        %s255 = scalar_select %p254, %s21, 1
        %s256 = scalar_lea.vmem %s0, %s255
      $region36: #{local_activation_unit.2} parent=31 // pred_fallthru
        _
      // Predicated region
      $region37: #{local_activation_unit.2} parent=31 // pred_check
        %p257 = pneg %p74
      $region38: #{local_activation_unit.2} parent=31 // pred_check_branch
        %259 = sbr.rel (%p257) target = $region40
      $region39: #{local_activation_unit.2} parent=31 // pred_region
        %p260 = scmp.lt.s32.totalorder %s21, 1
        %s261 = scalar_select %p260, %s21, 1
        %p262 = scmp.lt.s32.totalorder %s22, 0
        %s263 = scalar_select %p262, %s22, 0
        %s264 = sadd.s32 %s263, %s261
        %s265 = smul.addr %s264, 8
        %s266 = scalar_lea.vmem %s1, %s265
      $region40: #{local_activation_unit.2} parent=31 // pred_fallthru
        _
    $region32: #{local_activation_unit.2} parent=5 // pred_fallthru
      _
    %p267 = scmp.le.s32.totalorder 1, %s14
    %p268 = scmp.lt.s32.totalorder %s14, 3
    %p269 = pnand %p267, %p268
    %p270 = pneg %p269
    // Predicated region
    $region41: #{local_activation_unit.2} parent=5 // pred_check
      _
    $region42: #{local_activation_unit.2} parent=5 // pred_check_branch
      %272 = sbr.rel (%p269) target = $region44
    $region43: #{local_activation_unit.2} parent=5 // pred_region
      %s273 = ssub.s32 %s14, 1
      %p274 = scmp.lt.s32.totalorder %s23, 1
      %s275 = scalar_select %p274, %s23, 1
      %s276 = scalar_lea.vmem %s0, %s275
      %p277 = pneg %p52
      %p278 = pneg %p49
      %p279 = scmp.lt.s32.totalorder %s23, 1
      %s280 = scalar_select %p279, %s23, 1
      %p281 = scmp.lt.s32.totalorder %s24, 0
      %s282 = scalar_select %p281, %s24, 0
      %s283 = sadd.s32 %s282, %s280
      %s284 = smul.addr %s283, 8
      %s285 = scalar_lea.vmem %s1, %s284
      %p286 = pneg %p80
      %p287 = pneg %p77
      %p288 = pneg %p101
      %p289 = pneg %p98
      %p290 = pneg %p122
      %p291 = pneg %p119
      %p292 = pneg %p143
      %p293 = pneg %p140
      %p294 = pneg %p164
      %p295 = pneg %p161
      %p296 = pneg %p192
      %p297 = pneg %p189
      %p298 = scmp.lt.s32.totalorder %s23, 1
      %s299 = scalar_select %p298, %s23, 1
      %p300 = scmp.lt.s32.totalorder %s24, 0
      %s301 = scalar_select %p300, %s24, 0
      %s302 = sadd.s32 %s301, %s299
      %s303 = scalar_lea.vmem %s6, %s302
      %p304 = pneg %p220
      %p305 = pneg %p217
      %p306 = scmp.lt.s32.totalorder %s23, 1
      %s307 = scalar_select %p306, %s23, 1
      %p308 = scmp.lt.s32.totalorder %s24, 0
      %s309 = scalar_select %p308, %s24, 0
      %s310 = sadd.s32 %s309, %s307
      %s311 = scalar_lea.vmem %s7, %s310
      %p312 = scmp.lt.s32.totalorder %s23, 1
      %s313 = scalar_select %p312, %s23, 1
      %s314 = scalar_lea.vmem %s0, %s313
      %p315 = scmp.lt.s32.totalorder %s23, 1
      %s316 = scalar_select %p315, %s23, 1
      %p317 = scmp.lt.s32.totalorder %s24, 0
      %s318 = scalar_select %p317, %s24, 0
      %s319 = sadd.s32 %s318, %s316
      %s320 = smul.addr %s319, 8
      %s321 = scalar_lea.vmem %s1, %s320
      %p322 = scmp.lt.s32.totalorder %s23, 1
      %s323 = scalar_select %p322, %s23, 1
      %p324 = scmp.lt.s32.totalorder %s24, 0
      %s325 = scalar_select %p324, %s24, 0
      %s326 = sadd.s32 %s325, %s323
      %s327 = scalar_lea.vmem %s6, %s326
      %p328 = scmp.lt.s32.totalorder %s23, 1
      %s329 = scalar_select %p328, %s23, 1
      %p330 = scmp.lt.s32.totalorder %s24, 0
      %s331 = scalar_select %p330, %s24, 0
      %s332 = sadd.s32 %s331, %s329
      %s333 = scalar_lea.vmem %s7, %s332
      %v334 = vld [vmem:[%s314] sm:$0x1]
      %v335 = vld [vmem:[%s321] sm:$0xff]
      %v336 = vld [vmem:[%s2] sm:$0xff]
      %vm337 = vcmask 64512
      %v339 = vsel %vm337, %v334, 0
      %341 = vmatpush.msra.mxu0 0.0
      %342 = vmatpush.msra.mxu0 0.0
      %343 = vmatpush.msra.mxu0 0.0
      %344 = vmatpush.msra.mxu0 0.0
      %345 = vmatpush.msra.mxu0 0.0
      %346 = vmatpush.msra.mxu0 0.0
      %347 = vmatpush.msra.mxu0 0.0
      %348 = vmatpush.msra.mxu0 0.0
      %349 = vmatpush.msra.mxu0 0.0
      %350 = vmatpush.msra.mxu0 0.0
      %351 = vmatpush.msra.mxu0 0.0
      %352 = vmatpush.msra.mxu0 0.0
      %353 = vmatpush.msra.mxu0 0.0
      %354 = vmatpush.msra.mxu0 0.0
      %355 = vmatpush.msra.mxu0 0.0
      %356 = vmatpush.msra.mxu0 %v336
      %357 = vmatmul.f32.gmra.mxu0 %v339
      %v358 = vpop.f32.mrf.mxu0
      %v359 = vadd.f32 0.0, %v358
      %360 = vdwg.mxu0
      %v361 = vld [vmem:[%s3] sm:$0xff]
      %v363 = vsel %vm337, %v335, 0
      %365 = vmatpush.msra.mxu0 0.0
      %366 = vmatpush.msra.mxu0 0.0
      %367 = vmatpush.msra.mxu0 0.0
      %368 = vmatpush.msra.mxu0 0.0
      %369 = vmatpush.msra.mxu0 0.0
      %370 = vmatpush.msra.mxu0 0.0
      %371 = vmatpush.msra.mxu0 0.0
      %372 = vmatpush.msra.mxu0 0.0
      %373 = vmatpush.msra.mxu0 0.0
      %374 = vmatpush.msra.mxu0 0.0
      %375 = vmatpush.msra.mxu0 0.0
      %376 = vmatpush.msra.mxu0 0.0
      %377 = vmatpush.msra.mxu0 0.0
      %378 = vmatpush.msra.mxu0 0.0
      %379 = vmatpush.msra.mxu0 0.0
      %380 = vmatpush.msra.mxu0 %v361
      %381 = vmatmul.f32.gmra.mxu0 %v363
      %v382 = vpop.f32.mrf.mxu0
      %v383 = vadd.f32 0.0, %v382
      %384 = vdwg.mxu0
      %v385 = vperm.slane %v359, 0
      %v386 = vadd.f32 %v385, %v383
      %v387 = vperm.slane %v334, 0
      %v389 = vmul.f32 %v387, %v335
      %v390 = vld [vmem:[%s4] sm:$0xff]
      %v392 = vsel %vm337, %v389, 0
      %394 = vmatpush.msra.mxu0 0.0
      %395 = vmatpush.msra.mxu0 0.0
      %396 = vmatpush.msra.mxu0 0.0
      %397 = vmatpush.msra.mxu0 0.0
      %398 = vmatpush.msra.mxu0 0.0
      %399 = vmatpush.msra.mxu0 0.0
      %400 = vmatpush.msra.mxu0 0.0
      %401 = vmatpush.msra.mxu0 0.0
      %402 = vmatpush.msra.mxu0 0.0
      %403 = vmatpush.msra.mxu0 0.0
      %404 = vmatpush.msra.mxu0 0.0
      %405 = vmatpush.msra.mxu0 0.0
      %406 = vmatpush.msra.mxu0 0.0
      %407 = vmatpush.msra.mxu0 0.0
      %408 = vmatpush.msra.mxu0 0.0
      %409 = vmatpush.msra.mxu0 %v390
      %410 = vmatmul.f32.gmra.mxu0 %v392
      %v411 = vpop.f32.mrf.mxu0
      %v412 = vadd.f32 0.0, %v411
      %413 = vdwg.mxu0
      %v414 = vadd.f32 %v386, %v412
      %v415 = vld [vmem:[%s5] sm:$0x1]
      %v417 = vperm.slane %v415, 0
      %v419 = vadd.f32 %v414, %v417
      %v420 = vlaneseq
      %v421 = vshrl.u32 %v420, 7
      %s422 = smul.u32 %s24, 8
      %v423 = vstv %s422
      %v424 = vadd.s32 %v421, %v423
      %vm425 = vcmp.lt.s32.totalorder %v424, 8
      %v426 = vsel %vm425, 1, 0
      %v427 = vcvt.s32.f32 %v426
      %v428 = vmul.f32 %v419, %v427
      %vm429 = vcmask 261120
      %v430 = vsel %vm429, %v428, 0.0
      %v431 = vrot.slane %v430, 4
      %v432 = vadd.f32 %v430, %v431
      %v433 = vrot.slane %v432, 2
      %v434 = vadd.f32 %v432, %v433
      %v435 = vrot.slane %v434, 1
      %v436 = vadd.f32 %v434, %v435
      %vm437 = vcmask 253952
      %438 = vst.msk [vmem:[%s327] sm:$0x1] %vm437, %v436
      %v439 = vmul.f32 %v428, %v419
      %v440 = vsel %vm429, %v439, 0.0
      %v441 = vrot.slane %v440, 4
      %v442 = vadd.f32 %v440, %v441
      %v443 = vrot.slane %v442, 2
      %v444 = vadd.f32 %v442, %v443
      %v445 = vrot.slane %v444, 1
      %v446 = vadd.f32 %v444, %v445
      %447 = vst.msk [vmem:[%s333] sm:$0x1] %vm437, %v446
      %p448 = scmp.lt.s32.totalorder %s23, 1
      %s449 = scalar_select %p448, %s23, 1
      %p450 = scmp.lt.s32.totalorder %s24, 0
      %s451 = scalar_select %p450, %s24, 0
      %s452 = sadd.s32 %s451, %s449
      %s453 = scalar_lea.vmem %s6, %s452
      %p454 = scmp.lt.s32.totalorder %s23, 1
      %s455 = scalar_select %p454, %s23, 1
      %p456 = scmp.lt.s32.totalorder %s24, 0
      %s457 = scalar_select %p456, %s24, 0
      %s458 = sadd.s32 %s457, %s455
      %s459 = scalar_lea.vmem %s7, %s458
      // Predicated region
      $region45: #{local_activation_unit.2} parent=43 // pred_check
        %p460 = pneg %p189
      $region46: #{local_activation_unit.2} parent=43 // pred_check_branch
        %462 = sbr.rel (%p460) target = $region48
      $region47: #{local_activation_unit.2} parent=43 // pred_region
        _
      $region48: #{local_activation_unit.2} parent=43 // pred_fallthru
        _
      // Predicated region
      $region49: #{local_activation_unit.2} parent=43 // pred_check
        %p463 = pneg %p217
      $region50: #{local_activation_unit.2} parent=43 // pred_check_branch
        %465 = sbr.rel (%p463) target = $region52
      $region51: #{local_activation_unit.2} parent=43 // pred_region
        _
      $region52: #{local_activation_unit.2} parent=43 // pred_fallthru
        _
    $region44: #{local_activation_unit.2} parent=5 // pred_fallthru
      _
    %p466 = scmp.le.s32.totalorder 2, %s14
    // Predicated region
    $region53: #{local_activation_unit.2} parent=5 // pred_check
      %p467 = pneg %p466
    $region54: #{local_activation_unit.2} parent=5 // pred_check_branch
      %469 = sbr.rel (%p467) target = $region56
    $region55: #{local_activation_unit.2} parent=5 // pred_region
      %s470 = ssub.s32 %s14, 2
      // Predicated region
      $region57: #{local_activation_unit.2} parent=55 // pred_check
        %p471 = pneg %p195
      $region58: #{local_activation_unit.2} parent=55 // pred_check_branch
        %473 = sbr.rel (%p471) target = $region60
      $region59: #{local_activation_unit.2} parent=55 // pred_region
        %p474 = scmp.lt.s32.totalorder %s25, 1
        %s475 = scalar_select %p474, %s25, 1
        %p476 = scmp.lt.s32.totalorder %s26, 0
        %s477 = scalar_select %p476, %s26, 0
        %s478 = sadd.s32 %s477, %s475
        %s479 = scalar_lea.vmem %s6, %s478
      $region60: #{local_activation_unit.2} parent=55 // pred_fallthru
        _
      // Predicated region
      $region61: #{local_activation_unit.2} parent=55 // pred_check
        %p480 = pneg %p223
      $region62: #{local_activation_unit.2} parent=55 // pred_check_branch
        %482 = sbr.rel (%p480) target = $region64
      $region63: #{local_activation_unit.2} parent=55 // pred_region
        %p483 = scmp.lt.s32.totalorder %s25, 1
        %s484 = scalar_select %p483, %s25, 1
        %p485 = scmp.lt.s32.totalorder %s26, 0
        %s486 = scalar_select %p485, %s26, 0
        %s487 = sadd.s32 %s486, %s484
        %s488 = scalar_lea.vmem %s7, %s487
      $region64: #{local_activation_unit.2} parent=55 // pred_fallthru
        _
    $region56: #{local_activation_unit.2} parent=5 // pred_fallthru
      _
  $region6: #{local_activation_unit.2} parent=0 // loop_footer
    %s18 = sadd.s32 1, %s14
  $region7: #{local_activation_unit.2} parent=0 // loop_footer_branch
    %13 = sbr.rel target = $region3
  $region8: #{local_activation_unit.2} parent=0 // loop_exit
    _

// kernel: local_activation_unit.3
$region0: #{local_activation_unit.3}
  #allocation0 [shape = 'u32[]', space=smem, size = 0x4, offset = 0x4, fixed_abs, tag = 'smem constant byte address 0x4 - core index']
  #allocation1 [shape = 'u32[72,128]{1,0:T(1,128)}', space=vmem, size = 0x9000, scoped, tag = 'internal scratch']
  #allocation2 [shape = 'f32[1,1]{1,0:T(1,128)S(1)}', space=vmem, size = 0x200, scoped, tag = 'scoped memory for local_activation_unit.3']
  %s0 = inlined_call_operand.vmem [shape: f32[2,1,8], index: 0, kind: input, shape index: {}]
  %s1 = inlined_call_operand.vmem [shape: f32[2,8,8], index: 1, kind: input, shape index: {}]
  %s2 = inlined_call_operand.vmem [shape: f32[8,32], index: 2, kind: input, shape index: {}]
  %s3 = inlined_call_operand.vmem [shape: f32[8,32], index: 3, kind: input, shape index: {}]
  %s4 = inlined_call_operand.vmem [shape: f32[8,32], index: 4, kind: input, shape index: {}]
  %s5 = inlined_call_operand.vmem [shape: f32[1,32], index: 5, kind: input, shape index: {}]
  %s6 = inlined_call_operand.vmem [shape: f32[1,32], index: 6, kind: input, shape index: {}]
  %s7 = inlined_call_operand.vmem [shape: f32[1,32], index: 7, kind: input, shape index: {}]
  %s8 = inlined_call_operand.vmem [shape: f32[1,32], index: 8, kind: input, shape index: {}]
  %s9 = inlined_call_operand.vmem [shape: f32[1,32], index: 9, kind: input, shape index: {}]
  %s10 = inlined_call_operand.<no memory space> [shape: f32[1,1], index: 10, kind: input, shape index: {}]
  %s11 = inlined_call_operand.hbm [shape: f32[2,1,1,8], index: 11, kind: output, shape index: {}]
  %s12 = sld [smem:[#allocation0]]
  $region77: #{local_activation_unit.3} parent=0
    _
  %s14 = ssub.s32 1, %s12
  %s15 = scalar_select 0, %s14, %s12
  %v16 = vstv %s10
  %17 = vst [vmem:[#allocation2] sm:$0x1] %v16
  $region1: #{local_activation_unit.3} parent=0
    #allocation3 [shape = 'u8[1024]{0}', space=vmem, size = 0x400, scoped, tag = 'output window, operand 0']
    #allocation4 [shape = 's32[2]{0}', space=sflag, size = 0x8, scoped, tag = 'scoped memory for local_activation_unit.3']
    %18 = vsyncpa [#allocation4], 0
    %s19 = scalar_lea.sflag [#allocation4], 1
    %20 = vsyncpa %s19, 0
    loop: start=0, step=1, limit=4
    $region2: #{local_activation_unit.3} parent=1 // loop_pre_header
      _
    $region3: #{local_activation_unit.3} parent=1 // loop_header
      %s22 = sphi 0, %s26
      %p23 = scmp.ge.s32.totalorder %s22, 4
      %s29 = sphi 0, %s41
      %s30 = sphi 0, %s37
      %s31 = sphi 0, %s29
      %s32 = sphi 0, %s30
      %s33 = sphi 0, %s31
      %s34 = sphi 0, %s32
      %s44 = sphi 0, %s46
      %s47 = sphi 0, %s44
      %s48 = sphi 0, %s47
      %s64 = sphi 0, %s48
      %s72 = sphi 0, %s74
      %s75 = sphi 0, %s72
      %s76 = sphi 0, %s75
      %s92 = sphi 0, %s76
      %s96 = sphi 0, %s96
      %s98 = sphi 0, %s96
      %s99 = sphi 0, %s98
      %s113 = sphi 0, %s99
      %s117 = sphi 0, %s117
      %s119 = sphi 0, %s117
      %s120 = sphi 0, %s119
      %s134 = sphi 0, %s120
      %s138 = sphi 0, %s138
      %s140 = sphi 0, %s138
      %s141 = sphi 0, %s140
      %s155 = sphi 0, %s141
      %s159 = sphi 0, %s159
      %s161 = sphi 0, %s159
      %s162 = sphi 0, %s161
      %s176 = sphi 0, %s162
      %s180 = sphi 0, %s180
      %s182 = sphi 0, %s180
      %s183 = sphi 0, %s182
      %s197 = sphi 0, %s183
      %s201 = sphi 0, %s201
      %s203 = sphi 0, %s201
      %s204 = sphi 0, %s203
      %s218 = sphi 0, %s204
      %s222 = sphi 0, %s222
      %s224 = sphi 0, %s222
      %s225 = sphi 0, %s224
      %s239 = sphi 0, %s225
      %s243 = sphi 0, %s243
      %s245 = sphi 0, %s243
      %s246 = sphi 0, %s245
      %s260 = sphi 0, %s246
      %s264 = sphi 0, %s264
      %s266 = sphi 0, %s264
      %s267 = sphi 0, %s266
      %s281 = sphi 0, %s267
      %s289 = sphi 0, %s291
      %s292 = sphi 0, %s289
      %s293 = sphi 0, %s292
      %s309 = sphi 0, %s293
    $region4: #{local_activation_unit.3} parent=1 // loop_header_branch
      %25 = sbr.rel (%p23) target = $region8
    $region5: #{local_activation_unit.3} parent=1 // loop_body
      %s27 = ssub.s32 %s22, 1
      %s28 = ssub.s32 %s22, 2
      %s35 = sadd.s32 1, %s30
      %p36 = scmp.ge.s32.totalorder %s35, 1
      %s37 = scalar_select %p36, 0, %s35
      %s38 = sadd.s32 1, %s29
      %s39 = scalar_select %p36, %s38, %s29
      %p40 = scmp.ge.s32.totalorder %s39, 2
      %s41 = scalar_select %p40, 0, %s39
      %s42 = ssub.s32 %s29, %s41
      %p43 = scmp.eq.s32.totalorder %s42, 0
      %s45 = sadd.s32 %s44, 1
      %s46 = scalar_select %p43, %s44, %s45
      %p49 = pneg %p43
      %p50 = scmp.eq.s32.totalorder %s22, 1
      %p51 = por %p49, %p50
      %p52 = scmp.ne.s32.totalorder %s44, %s47
      %p53 = scmp.eq.s32.totalorder %s22, 0
      %p54 = por %p52, %p53
      %p55 = scmp.ne.s32.totalorder %s44, %s47
      %p56 = scmp.eq.s32.totalorder %s27, 1
      %p57 = por %p55, %p56
      %p58 = scmp.ne.s32.totalorder %s47, %s48
      %p59 = scmp.eq.s32.totalorder %s27, 0
      %p60 = por %p58, %p59
      %p61 = scmp.ne.s32.totalorder %s47, %s48
      %p62 = scmp.eq.s32.totalorder %s28, 1
      %p63 = por %p61, %p62
      %p65 = scmp.ne.s32.totalorder %s48, %s64
      %p66 = scmp.eq.s32.totalorder %s28, 0
      %p67 = por %p65, %p66
      %s68 = ssub.s32 %s29, %s41
      %s69 = ssub.s32 %s30, %s37
      %s70 = sor.u32 %s68, %s69
      %p71 = scmp.eq.s32.totalorder %s70, 0
      %s73 = sadd.s32 %s72, 1
      %s74 = scalar_select %p71, %s72, %s73
      %p77 = pneg %p71
      %p78 = scmp.eq.s32.totalorder %s22, 1
      %p79 = por %p77, %p78
      %p80 = scmp.ne.s32.totalorder %s72, %s75
      %p81 = scmp.eq.s32.totalorder %s22, 0
      %p82 = por %p80, %p81
      %p83 = scmp.ne.s32.totalorder %s72, %s75
      %p84 = scmp.eq.s32.totalorder %s27, 1
      %p85 = por %p83, %p84
      %p86 = scmp.ne.s32.totalorder %s75, %s76
      %p87 = scmp.eq.s32.totalorder %s27, 0
      %p88 = por %p86, %p87
      %p89 = scmp.ne.s32.totalorder %s75, %s76
      %p90 = scmp.eq.s32.totalorder %s28, 1
      %p91 = por %p89, %p90
      %p93 = scmp.ne.s32.totalorder %s76, %s92
      %p94 = scmp.eq.s32.totalorder %s28, 0
      %p95 = por %p93, %p94
      %s97 = sadd.s32 %s96, 1
      %p100 = scmp.eq.s32.totalorder %s22, 1
      %p101 = scmp.ne.s32.totalorder %s96, %s98
      %p102 = scmp.eq.s32.totalorder %s22, 0
      %p103 = por %p101, %p102
      %p104 = scmp.ne.s32.totalorder %s96, %s98
      %p105 = scmp.eq.s32.totalorder %s27, 1
      %p106 = por %p104, %p105
      %p107 = scmp.ne.s32.totalorder %s98, %s99
      %p108 = scmp.eq.s32.totalorder %s27, 0
      %p109 = por %p107, %p108
      %p110 = scmp.ne.s32.totalorder %s98, %s99
      %p111 = scmp.eq.s32.totalorder %s28, 1
      %p112 = por %p110, %p111
      %p114 = scmp.ne.s32.totalorder %s99, %s113
      %p115 = scmp.eq.s32.totalorder %s28, 0
      %p116 = por %p114, %p115
      %s118 = sadd.s32 %s117, 1
      %p121 = scmp.eq.s32.totalorder %s22, 1
      %p122 = scmp.ne.s32.totalorder %s117, %s119
      %p123 = scmp.eq.s32.totalorder %s22, 0
      %p124 = por %p122, %p123
      %p125 = scmp.ne.s32.totalorder %s117, %s119
      %p126 = scmp.eq.s32.totalorder %s27, 1
      %p127 = por %p125, %p126
      %p128 = scmp.ne.s32.totalorder %s119, %s120
      %p129 = scmp.eq.s32.totalorder %s27, 0
      %p130 = por %p128, %p129
      %p131 = scmp.ne.s32.totalorder %s119, %s120
      %p132 = scmp.eq.s32.totalorder %s28, 1
      %p133 = por %p131, %p132
      %p135 = scmp.ne.s32.totalorder %s120, %s134
      %p136 = scmp.eq.s32.totalorder %s28, 0
      %p137 = por %p135, %p136
      %s139 = sadd.s32 %s138, 1
      %p142 = scmp.eq.s32.totalorder %s22, 1
      %p143 = scmp.ne.s32.totalorder %s138, %s140
      %p144 = scmp.eq.s32.totalorder %s22, 0
      %p145 = por %p143, %p144
      %p146 = scmp.ne.s32.totalorder %s138, %s140
      %p147 = scmp.eq.s32.totalorder %s27, 1
      %p148 = por %p146, %p147
      %p149 = scmp.ne.s32.totalorder %s140, %s141
      %p150 = scmp.eq.s32.totalorder %s27, 0
      %p151 = por %p149, %p150
      %p152 = scmp.ne.s32.totalorder %s140, %s141
      %p153 = scmp.eq.s32.totalorder %s28, 1
      %p154 = por %p152, %p153
      %p156 = scmp.ne.s32.totalorder %s141, %s155
      %p157 = scmp.eq.s32.totalorder %s28, 0
      %p158 = por %p156, %p157
      %s160 = sadd.s32 %s159, 1
      %p163 = scmp.eq.s32.totalorder %s22, 1
      %p164 = scmp.ne.s32.totalorder %s159, %s161
      %p165 = scmp.eq.s32.totalorder %s22, 0
      %p166 = por %p164, %p165
      %p167 = scmp.ne.s32.totalorder %s159, %s161
      %p168 = scmp.eq.s32.totalorder %s27, 1
      %p169 = por %p167, %p168
      %p170 = scmp.ne.s32.totalorder %s161, %s162
      %p171 = scmp.eq.s32.totalorder %s27, 0
      %p172 = por %p170, %p171
      %p173 = scmp.ne.s32.totalorder %s161, %s162
      %p174 = scmp.eq.s32.totalorder %s28, 1
      %p175 = por %p173, %p174
      %p177 = scmp.ne.s32.totalorder %s162, %s176
      %p178 = scmp.eq.s32.totalorder %s28, 0
      %p179 = por %p177, %p178
      %s181 = sadd.s32 %s180, 1
      %p184 = scmp.eq.s32.totalorder %s22, 1
      %p185 = scmp.ne.s32.totalorder %s180, %s182
      %p186 = scmp.eq.s32.totalorder %s22, 0
      %p187 = por %p185, %p186
      %p188 = scmp.ne.s32.totalorder %s180, %s182
      %p189 = scmp.eq.s32.totalorder %s27, 1
      %p190 = por %p188, %p189
      %p191 = scmp.ne.s32.totalorder %s182, %s183
      %p192 = scmp.eq.s32.totalorder %s27, 0
      %p193 = por %p191, %p192
      %p194 = scmp.ne.s32.totalorder %s182, %s183
      %p195 = scmp.eq.s32.totalorder %s28, 1
      %p196 = por %p194, %p195
      %p198 = scmp.ne.s32.totalorder %s183, %s197
      %p199 = scmp.eq.s32.totalorder %s28, 0
      %p200 = por %p198, %p199
      %s202 = sadd.s32 %s201, 1
      %p205 = scmp.eq.s32.totalorder %s22, 1
      %p206 = scmp.ne.s32.totalorder %s201, %s203
      %p207 = scmp.eq.s32.totalorder %s22, 0
      %p208 = por %p206, %p207
      %p209 = scmp.ne.s32.totalorder %s201, %s203
      %p210 = scmp.eq.s32.totalorder %s27, 1
      %p211 = por %p209, %p210
      %p212 = scmp.ne.s32.totalorder %s203, %s204
      %p213 = scmp.eq.s32.totalorder %s27, 0
      %p214 = por %p212, %p213
      %p215 = scmp.ne.s32.totalorder %s203, %s204
      %p216 = scmp.eq.s32.totalorder %s28, 1
      %p217 = por %p215, %p216
      %p219 = scmp.ne.s32.totalorder %s204, %s218
      %p220 = scmp.eq.s32.totalorder %s28, 0
      %p221 = por %p219, %p220
      %s223 = sadd.s32 %s222, 1
      %p226 = scmp.eq.s32.totalorder %s22, 1
      %p227 = scmp.ne.s32.totalorder %s222, %s224
      %p228 = scmp.eq.s32.totalorder %s22, 0
      %p229 = por %p227, %p228
      %p230 = scmp.ne.s32.totalorder %s222, %s224
      %p231 = scmp.eq.s32.totalorder %s27, 1
      %p232 = por %p230, %p231
      %p233 = scmp.ne.s32.totalorder %s224, %s225
      %p234 = scmp.eq.s32.totalorder %s27, 0
      %p235 = por %p233, %p234
      %p236 = scmp.ne.s32.totalorder %s224, %s225
      %p237 = scmp.eq.s32.totalorder %s28, 1
      %p238 = por %p236, %p237
      %p240 = scmp.ne.s32.totalorder %s225, %s239
      %p241 = scmp.eq.s32.totalorder %s28, 0
      %p242 = por %p240, %p241
      %s244 = sadd.s32 %s243, 1
      %p247 = scmp.eq.s32.totalorder %s22, 1
      %p248 = scmp.ne.s32.totalorder %s243, %s245
      %p249 = scmp.eq.s32.totalorder %s22, 0
      %p250 = por %p248, %p249
      %p251 = scmp.ne.s32.totalorder %s243, %s245
      %p252 = scmp.eq.s32.totalorder %s27, 1
      %p253 = por %p251, %p252
      %p254 = scmp.ne.s32.totalorder %s245, %s246
      %p255 = scmp.eq.s32.totalorder %s27, 0
      %p256 = por %p254, %p255
      %p257 = scmp.ne.s32.totalorder %s245, %s246
      %p258 = scmp.eq.s32.totalorder %s28, 1
      %p259 = por %p257, %p258
      %p261 = scmp.ne.s32.totalorder %s246, %s260
      %p262 = scmp.eq.s32.totalorder %s28, 0
      %p263 = por %p261, %p262
      %s265 = sadd.s32 %s264, 1
      %p268 = scmp.eq.s32.totalorder %s22, 1
      %p269 = scmp.ne.s32.totalorder %s264, %s266
      %p270 = scmp.eq.s32.totalorder %s22, 0
      %p271 = por %p269, %p270
      %p272 = scmp.ne.s32.totalorder %s264, %s266
      %p273 = scmp.eq.s32.totalorder %s27, 1
      %p274 = por %p272, %p273
      %p275 = scmp.ne.s32.totalorder %s266, %s267
      %p276 = scmp.eq.s32.totalorder %s27, 0
      %p277 = por %p275, %p276
      %p278 = scmp.ne.s32.totalorder %s266, %s267
      %p279 = scmp.eq.s32.totalorder %s28, 1
      %p280 = por %p278, %p279
      %p282 = scmp.ne.s32.totalorder %s267, %s281
      %p283 = scmp.eq.s32.totalorder %s28, 0
      %p284 = por %p282, %p283
      %s285 = ssub.s32 %s29, %s41
      %s286 = ssub.s32 %s30, %s37
      %s287 = sor.u32 %s285, %s286
      %p288 = scmp.eq.s32.totalorder %s287, 0
      %s290 = sadd.s32 %s289, 1
      %s291 = scalar_select %p288, %s289, %s290
      %p294 = pneg %p288
      %p295 = scmp.eq.s32.totalorder %s22, 1
      %p296 = por %p294, %p295
      %p297 = scmp.ne.s32.totalorder %s289, %s292
      %p298 = scmp.eq.s32.totalorder %s22, 0
      %p299 = por %p297, %p298
      %p300 = scmp.ne.s32.totalorder %s289, %s292
      %p301 = scmp.eq.s32.totalorder %s27, 1
      %p302 = por %p300, %p301
      %p303 = scmp.ne.s32.totalorder %s292, %s293
      %p304 = scmp.eq.s32.totalorder %s27, 0
      %p305 = por %p303, %p304
      %p306 = scmp.ne.s32.totalorder %s292, %s293
      %p307 = scmp.eq.s32.totalorder %s28, 1
      %p308 = por %p306, %p307
      %p310 = scmp.ne.s32.totalorder %s293, %s309
      %p311 = scmp.eq.s32.totalorder %s28, 0
      %p312 = por %p310, %p311
      %p313 = scmp.le.s32.totalorder 1, %s22
      %p314 = scmp.lt.s32.totalorder %s22, 3
      %p315 = pnand %p313, %p314
      %p316 = pneg %p315
      // Predicated region
      $region9: #{local_activation_unit.3} parent=5 // pred_check
        _
      $region10: #{local_activation_unit.3} parent=5 // pred_check_branch
        %318 = sbr.rel (%p315) target = $region12
      $region11: #{local_activation_unit.3} parent=5 // pred_region
        %s319 = ssub.s32 %s22, 1
        // Predicated region
        $region13: #{local_activation_unit.3} parent=11 // pred_check
          %p320 = pneg %p109
        $region14: #{local_activation_unit.3} parent=11 // pred_check_branch
          %322 = sbr.rel (%p320) target = $region16
        $region15: #{local_activation_unit.3} parent=11 // pred_region
          _
        $region16: #{local_activation_unit.3} parent=11 // pred_fallthru
          _
        // Predicated region
        $region17: #{local_activation_unit.3} parent=11 // pred_check
          %p323 = pneg %p130
        $region18: #{local_activation_unit.3} parent=11 // pred_check_branch
          %325 = sbr.rel (%p323) target = $region20
        $region19: #{local_activation_unit.3} parent=11 // pred_region
          _
        $region20: #{local_activation_unit.3} parent=11 // pred_fallthru
          _
        // Predicated region
        $region21: #{local_activation_unit.3} parent=11 // pred_check
          %p326 = pneg %p151
        $region22: #{local_activation_unit.3} parent=11 // pred_check_branch
          %328 = sbr.rel (%p326) target = $region24
        $region23: #{local_activation_unit.3} parent=11 // pred_region
          _
        $region24: #{local_activation_unit.3} parent=11 // pred_fallthru
          _
        // Predicated region
        $region25: #{local_activation_unit.3} parent=11 // pred_check
          %p329 = pneg %p172
        $region26: #{local_activation_unit.3} parent=11 // pred_check_branch
          %331 = sbr.rel (%p329) target = $region28
        $region27: #{local_activation_unit.3} parent=11 // pred_region
          _
        $region28: #{local_activation_unit.3} parent=11 // pred_fallthru
          _
        // Predicated region
        $region29: #{local_activation_unit.3} parent=11 // pred_check
          %p332 = pneg %p193
        $region30: #{local_activation_unit.3} parent=11 // pred_check_branch
          %334 = sbr.rel (%p332) target = $region32
        $region31: #{local_activation_unit.3} parent=11 // pred_region
          _
        $region32: #{local_activation_unit.3} parent=11 // pred_fallthru
          _
        // Predicated region
        $region33: #{local_activation_unit.3} parent=11 // pred_check
          %p335 = pneg %p214
        $region34: #{local_activation_unit.3} parent=11 // pred_check_branch
          %337 = sbr.rel (%p335) target = $region36
        $region35: #{local_activation_unit.3} parent=11 // pred_region
          _
        $region36: #{local_activation_unit.3} parent=11 // pred_fallthru
          _
        // Predicated region
        $region37: #{local_activation_unit.3} parent=11 // pred_check
          %p338 = pneg %p235
        $region38: #{local_activation_unit.3} parent=11 // pred_check_branch
          %340 = sbr.rel (%p338) target = $region40
        $region39: #{local_activation_unit.3} parent=11 // pred_region
          _
        $region40: #{local_activation_unit.3} parent=11 // pred_fallthru
          _
        // Predicated region
        $region41: #{local_activation_unit.3} parent=11 // pred_check
          %p341 = pneg %p256
        $region42: #{local_activation_unit.3} parent=11 // pred_check_branch
          %343 = sbr.rel (%p341) target = $region44
        $region43: #{local_activation_unit.3} parent=11 // pred_region
          _
        $region44: #{local_activation_unit.3} parent=11 // pred_fallthru
          _
        // Predicated region
        $region45: #{local_activation_unit.3} parent=11 // pred_check
          %p344 = pneg %p277
        $region46: #{local_activation_unit.3} parent=11 // pred_check_branch
          %346 = sbr.rel (%p344) target = $region48
        $region47: #{local_activation_unit.3} parent=11 // pred_region
          _
        $region48: #{local_activation_unit.3} parent=11 // pred_fallthru
          _
      $region12: #{local_activation_unit.3} parent=5 // pred_fallthru
        _
      %p347 = scmp.lt.s32.totalorder %s22, 2
      // Predicated region
      $region49: #{local_activation_unit.3} parent=5 // pred_check
        %p348 = pneg %p347
      $region50: #{local_activation_unit.3} parent=5 // pred_check_branch
        %350 = sbr.rel (%p348) target = $region52
      $region51: #{local_activation_unit.3} parent=5 // pred_region
        // Predicated region
        $region53: #{local_activation_unit.3} parent=51 // pred_check
          %p351 = pneg %p54
        $region54: #{local_activation_unit.3} parent=51 // pred_check_branch
          %353 = sbr.rel (%p351) target = $region56
        $region55: #{local_activation_unit.3} parent=51 // pred_region
          %p354 = scmp.lt.s32.totalorder %s29, 1
          %s355 = scalar_select %p354, %s29, 1
          %s356 = scalar_lea.vmem %s0, %s355
        $region56: #{local_activation_unit.3} parent=51 // pred_fallthru
          _
        // Predicated region
        $region57: #{local_activation_unit.3} parent=51 // pred_check
          %p357 = pneg %p82
        $region58: #{local_activation_unit.3} parent=51 // pred_check_branch
          %359 = sbr.rel (%p357) target = $region60
        $region59: #{local_activation_unit.3} parent=51 // pred_region
          %p360 = scmp.lt.s32.totalorder %s29, 1
          %s361 = scalar_select %p360, %s29, 1
          %p362 = scmp.lt.s32.totalorder %s30, 0
          %s363 = scalar_select %p362, %s30, 0
          %s364 = sadd.s32 %s363, %s361
          %s365 = smul.addr %s364, 8
          %s366 = scalar_lea.vmem %s1, %s365
        $region60: #{local_activation_unit.3} parent=51 // pred_fallthru
          _
      $region52: #{local_activation_unit.3} parent=5 // pred_fallthru
        _
      %p367 = scmp.le.s32.totalorder 1, %s22
      %p368 = scmp.lt.s32.totalorder %s22, 3
      %p369 = pnand %p367, %p368
      %p370 = pneg %p369
      // Predicated region
      $region61: #{local_activation_unit.3} parent=5 // pred_check
        _
      $region62: #{local_activation_unit.3} parent=5 // pred_check_branch
        %372 = sbr.rel (%p369) target = $region64
      $region63: #{local_activation_unit.3} parent=5 // pred_region
        %s373 = ssub.s32 %s22, 1
        %p374 = scmp.lt.s32.totalorder %s31, 1
        %s375 = scalar_select %p374, %s31, 1
        %s376 = scalar_lea.vmem %s0, %s375
        %p377 = pneg %p60
        %p378 = pneg %p57
        %p379 = scmp.lt.s32.totalorder %s31, 1
        %s380 = scalar_select %p379, %s31, 1
        %p381 = scmp.lt.s32.totalorder %s32, 0
        %s382 = scalar_select %p381, %s32, 0
        %s383 = sadd.s32 %s382, %s380
        %s384 = smul.addr %s383, 8
        %s385 = scalar_lea.vmem %s1, %s384
        %p386 = pneg %p88
        %p387 = pneg %p85
        %p388 = pneg %p109
        %p389 = pneg %p106
        %p390 = pneg %p130
        %p391 = pneg %p127
        %p392 = pneg %p151
        %p393 = pneg %p148
        %p394 = pneg %p172
        %p395 = pneg %p169
        %p396 = pneg %p193
        %p397 = pneg %p190
        %p398 = pneg %p214
        %p399 = pneg %p211
        %p400 = pneg %p235
        %p401 = pneg %p232
        %p402 = pneg %p256
        %p403 = pneg %p253
        %p404 = pneg %p277
        %p405 = pneg %p274
        %p406 = pneg %p305
        %p407 = pneg %p302
        %s408 = sand.u32 %s292, 1
        %s409 = scalar_lea.sflag [#allocation4], %s408
        %s410 = sand.u32 %s292, 1
        %s411 = scalar_lea.vmem [#allocation3], %s410
        %p412 = scmp.lt.s32.totalorder %s31, 1
        %s413 = scalar_select %p412, %s31, 1
        %s414 = scalar_lea.vmem %s0, %s413
        %p415 = scmp.lt.s32.totalorder %s31, 1
        %s416 = scalar_select %p415, %s31, 1
        %p417 = scmp.lt.s32.totalorder %s32, 0
        %s418 = scalar_select %p417, %s32, 0
        %s419 = sadd.s32 %s418, %s416
        %s420 = smul.addr %s419, 8
        %s421 = scalar_lea.vmem %s1, %s420
        %v422 = vld [vmem:[%s414] sm:$0x1]
        %v423 = vld [vmem:[%s421] sm:$0xff]
        %v424 = vld [vmem:[%s2] sm:$0xff]
        %vm425 = vcmask 64512
        %v427 = vsel %vm425, %v422, 0
        %429 = vmatpush.msra.mxu0 0.0
        %430 = vmatpush.msra.mxu0 0.0
        %431 = vmatpush.msra.mxu0 0.0
        %432 = vmatpush.msra.mxu0 0.0
        %433 = vmatpush.msra.mxu0 0.0
        %434 = vmatpush.msra.mxu0 0.0
        %435 = vmatpush.msra.mxu0 0.0
        %436 = vmatpush.msra.mxu0 0.0
        %437 = vmatpush.msra.mxu0 0.0
        %438 = vmatpush.msra.mxu0 0.0
        %439 = vmatpush.msra.mxu0 0.0
        %440 = vmatpush.msra.mxu0 0.0
        %441 = vmatpush.msra.mxu0 0.0
        %442 = vmatpush.msra.mxu0 0.0
        %443 = vmatpush.msra.mxu0 0.0
        %444 = vmatpush.msra.mxu0 %v424
        %445 = vmatmul.f32.gmra.mxu0 %v427
        %v446 = vpop.f32.mrf.mxu0
        %v447 = vadd.f32 0.0, %v446
        %448 = vdwg.mxu0
        %v449 = vld [vmem:[%s3] sm:$0xff]
        %v451 = vsel %vm425, %v423, 0
        %453 = vmatpush.msra.mxu0 0.0
        %454 = vmatpush.msra.mxu0 0.0
        %455 = vmatpush.msra.mxu0 0.0
        %456 = vmatpush.msra.mxu0 0.0
        %457 = vmatpush.msra.mxu0 0.0
        %458 = vmatpush.msra.mxu0 0.0
        %459 = vmatpush.msra.mxu0 0.0
        %460 = vmatpush.msra.mxu0 0.0
        %461 = vmatpush.msra.mxu0 0.0
        %462 = vmatpush.msra.mxu0 0.0
        %463 = vmatpush.msra.mxu0 0.0
        %464 = vmatpush.msra.mxu0 0.0
        %465 = vmatpush.msra.mxu0 0.0
        %466 = vmatpush.msra.mxu0 0.0
        %467 = vmatpush.msra.mxu0 0.0
        %468 = vmatpush.msra.mxu0 %v449
        %469 = vmatmul.f32.gmra.mxu0 %v451
        %v470 = vpop.f32.mrf.mxu0
        %v471 = vadd.f32 0.0, %v470
        %472 = vdwg.mxu0
        %v473 = vperm.slane %v447, 0
        %v474 = vadd.f32 %v473, %v471
        %v475 = vperm.slane %v422, 0
        %v477 = vmul.f32 %v475, %v423
        %v478 = vld [vmem:[%s4] sm:$0xff]
        %v480 = vsel %vm425, %v477, 0
        %482 = vmatpush.msra.mxu0 0.0
        %483 = vmatpush.msra.mxu0 0.0
        %484 = vmatpush.msra.mxu0 0.0
        %485 = vmatpush.msra.mxu0 0.0
        %486 = vmatpush.msra.mxu0 0.0
        %487 = vmatpush.msra.mxu0 0.0
        %488 = vmatpush.msra.mxu0 0.0
        %489 = vmatpush.msra.mxu0 0.0
        %490 = vmatpush.msra.mxu0 0.0
        %491 = vmatpush.msra.mxu0 0.0
        %492 = vmatpush.msra.mxu0 0.0
        %493 = vmatpush.msra.mxu0 0.0
        %494 = vmatpush.msra.mxu0 0.0
        %495 = vmatpush.msra.mxu0 0.0
        %496 = vmatpush.msra.mxu0 0.0
        %497 = vmatpush.msra.mxu0 %v478
        %498 = vmatmul.f32.gmra.mxu0 %v480
        %v499 = vpop.f32.mrf.mxu0
        %v500 = vadd.f32 0.0, %v499
        %501 = vdwg.mxu0
        %v502 = vadd.f32 %v474, %v500
        %v503 = vld [vmem:[%s5] sm:$0x1]
        %v505 = vperm.slane %v503, 0
        %v507 = vadd.f32 %v502, %v505
        %v508 = vld [vmem:[%s6] sm:$0x1]
        %v510 = vperm.slane %v508, 0
        %v512 = vmul.f32 %v507, %v510
        %v513 = vld [vmem:[%s7] sm:$0x1]
        %v515 = vperm.slane %v513, 0
        %v517 = vadd.f32 %v512, %v515
        %v518 = vxor.u32 %v517, 2147483648
        %v519 = vmul.f32 %v518, 1.442695
        %v520 = vpow.pop %v519
        %v521 = vadd.f32 %v520, 1.0
        %v522 = vrcp.pop %v521
        %v523 = vmul.f32 %v521, %v522
        %v524 = vsub.f32 1.0, %v523
        %v525 = vmul.f32 %v522, %v524
        %v526 = vadd.f32 %v522, %v525
        %vm527 = vweird.f32 %v521
        %vm528 = vweird.f32 %v522
        %vm529 = vmor %vm527, %vm528
        %v530 = vsel %vm529, %v522, %v526
        %v531 = vand.u32 2147483647, %v521
        %vm532 = vcmp.eq.f32.partialorder %v531, 8.507059e+37
        %v533 = vand.u32 %v521, 2147483648
        %v534 = vor.u32 1.1754944e-38, %v533
        %v535 = vsel %vm532, %v534, %v530
        %v536 = vmul.f32 1.0, %v535
        %v537 = vld [vmem:[%s8] sm:$0x1]
        %v538 = vsub.f32 1.0, %v536
        %v540 = vperm.slane %v537, 0
        %v542 = vmul.f32 %v540, %v538
        %v543 = vadd.f32 %v536, %v542
        %v544 = vmul.f32 %v507, %v543
        %v545 = vld [vmem:[%s9] sm:$0x1]
        %v546 = vld [vmem:[#allocation2] sm:$0x1]
        %548 = vset.pattern.permute.xlu0 0
        %549 = vperm.xlu0 %548, %v546
        %v550 = vpop.permute.xlu0 %549
        %v552 = vperm.slane %v550, 0
        %vm553 = vcmask 261120
        %v555 = vsel %vm553, %v545, 0
        %v558 = vsel %vm553, %v544, 0
        %560 = vmatpush.xpose.msra.mxu0 0.0
        %561 = vmatpush.xpose.msra.mxu0 0.0
        %562 = vmatpush.xpose.msra.mxu0 0.0
        %563 = vmatpush.xpose.msra.mxu0 0.0
        %564 = vmatpush.xpose.msra.mxu0 0.0
        %565 = vmatpush.xpose.msra.mxu0 0.0
        %566 = vmatpush.xpose.msra.mxu0 0.0
        %567 = vmatpush.xpose.msra.mxu0 0.0
        %568 = vmatpush.xpose.msra.mxu0 0.0
        %569 = vmatpush.xpose.msra.mxu0 0.0
        %570 = vmatpush.xpose.msra.mxu0 0.0
        %571 = vmatpush.xpose.msra.mxu0 0.0
        %572 = vmatpush.xpose.msra.mxu0 0.0
        %573 = vmatpush.xpose.msra.mxu0 0.0
        %574 = vmatpush.xpose.msra.mxu0 0.0
        %575 = vmatpush.xpose.msra.mxu0 %v558
        %576 = vmatmul.f32.gmra.mxu0 %v555
        %v577 = vpop.f32.mrf.mxu0
        %v578 = vadd.f32 %v552, %v577
        %579 = vdwg.mxu0
        %vm580 = vcmask 57344
        %581 = vst.msk [vmem:[%s411] sm:$0x1] %vm580, %v578
        %s582 = sand.u32 %s292, 1
        %s583 = scalar_lea.sflag [#allocation4], %s582
        %s584 = sand.u32 %s292, 1
        %s585 = scalar_lea.vmem [#allocation3], %s584
        // Predicated region
        $region65: #{local_activation_unit.3} parent=63 // pred_check
          %p586 = pneg %p302
        $region66: #{local_activation_unit.3} parent=63 // pred_check_branch
          %588 = sbr.rel (%p586) target = $region68
        $region67: #{local_activation_unit.3} parent=63 // pred_region
          %590 = vsyncadd %s583, 0
          %s591 = sadd.s32 %s32, %s31
          %s592 = scalar_lea.hbm %s11, %s591
          %s594 = sshll.u32 %s585, 4
          %s595 = int_to_ptr.vmem [resolvable:$true] %s594
          %s596 = sshll.u32 %s592, 4
          %s597 = int_to_ptr.hbm [resolvable:$true] %s596
          %599 = dma.vmem_to_hbm [thread:$0]  %s595, 16, %s597, %s583
        $region68: #{local_activation_unit.3} parent=63 // pred_fallthru
          _
      $region64: #{local_activation_unit.3} parent=5 // pred_fallthru
        _
      %p600 = scmp.le.s32.totalorder 2, %s22
      // Predicated region
      $region69: #{local_activation_unit.3} parent=5 // pred_check
        %p601 = pneg %p600
      $region70: #{local_activation_unit.3} parent=5 // pred_check_branch
        %603 = sbr.rel (%p601) target = $region72
      $region71: #{local_activation_unit.3} parent=5 // pred_region
        %s604 = ssub.s32 %s22, 2
        // Predicated region
        $region73: #{local_activation_unit.3} parent=71 // pred_check
          %p605 = pneg %p308
        $region74: #{local_activation_unit.3} parent=71 // pred_check_branch
          %607 = sbr.rel (%p605) target = $region76
        $region75: #{local_activation_unit.3} parent=71 // pred_region
          %s608 = sand.u32 %s293, 1
          %s609 = scalar_lea.sflag [#allocation4], %s608
          %s610 = sand.u32 %s293, 1
          %s611 = scalar_lea.vmem [#allocation3], %s610
          %613 = dma.done %s609, 16
        $region76: #{local_activation_unit.3} parent=71 // pred_fallthru
          _
      $region72: #{local_activation_unit.3} parent=5 // pred_fallthru
        _
    $region6: #{local_activation_unit.3} parent=1 // loop_footer
      %s26 = sadd.s32 1, %s22
    $region7: #{local_activation_unit.3} parent=1 // loop_footer_branch
      %21 = sbr.rel target = $region3
    $region8: #{local_activation_unit.3} parent=1 // loop_exit
      _
    %614 = vsyncpa [#allocation4], 1
    %s615 = scalar_lea.sflag [#allocation4], 1
    %616 = vsyncpa %s615, 1

</llo_original>
